<compile_context>
chip_gen: v7x
topology: tpu7x:2x2x1
jax: 0.10.0
libtpu: 0.0.40
codegen_flags: <defaults>
</compile_context>

<pallas_src>
import functools
import math

import jax
import jax.numpy as jnp
from jax.experimental import pallas as pl
from jax.experimental.pallas import tpu as pltpu


# ----------------------------------------------------------------------------
# Kernel helpers
# ----------------------------------------------------------------------------

def _ln(x, g, b, eps):
    """LayerNorm over the last axis (biased variance, like torch/HF)."""
    mu = jnp.mean(x, axis=-1, keepdims=True)
    var = jnp.mean(jnp.square(x - mu), axis=-1, keepdims=True)
    return (x - mu) * jax.lax.rsqrt(var + eps) * g + b


def _gelu(x):
    # tanh-approximate GELU (VPU/EUP only).
    # TODO(synk): switch to exact erf-GELU if bit-exactness vs HF BERT is needed.
    c = math.sqrt(2.0 / math.pi)
    return 0.5 * x * (1.0 + jnp.tanh(c * (x + 0.044715 * x * x * x)))


# ----------------------------------------------------------------------------
# Fused encoder kernel: embeddings-LN + L BERT layers + FC head
#   grid = (B, L); hidden state carried in VMEM scratch across the layer axis.
# ----------------------------------------------------------------------------

def _encoder_kernel(emb_ref, embg_ref, embb_ref,
                    wqkv_ref, bqkv_ref, wo_ref, bo_ref, ln1g_ref, ln1b_ref,
                    wi_ref, bi_ref, wo2_ref, bo2_ref, ln2g_ref, ln2b_ref,
                    fcw_ref, fcb_ref,
                    out_ref,
                    hid_ref,
                    *, num_heads, scale, eps):
    l = pl.program_id(1)
    num_layers = pl.num_programs(1)

    # --- layer 0: initialize the carried hidden state with the embedding LN ---
    @pl.when(l == 0)
    def _():
        hid_ref[...] = _ln(emb_ref[...], embg_ref[...], embb_ref[...], eps)

    h = hid_ref[...]                              # (S, H) float32
    S, H = h.shape
    dh = H // num_heads
    hb = h.astype(jnp.bfloat16)

    # --- packed QKV projection: one lane-dense (S,H)@(H,3H) matmul ---
    qkv = (jnp.dot(hb, wqkv_ref[...], preferred_element_type=jnp.float32)
           + bqkv_ref[...])                       # (S, 3H) f32

    # --- multi-head self-attention on static lane slices of qkv ---
    # (no attention mask: HF default all-ones)
    # TODO(synk): for real S=512, use a flash-style q-tile / KV-loop instead.
    ctx_heads = []
    for hh in range(num_heads):                   # tiny static loop
        q = qkv[:, hh * dh:(hh + 1) * dh] * scale
        k = qkv[:, H + hh * dh:H + (hh + 1) * dh]
        v = qkv[:, 2 * H + hh * dh:2 * H + (hh + 1) * dh]
        # scores = q @ k^T  (contract last dims; no explicit transpose)
        s = jax.lax.dot_general(q.astype(jnp.bfloat16), k.astype(jnp.bfloat16),
                                (((1,), (1,)), ((), ())),
                                preferred_element_type=jnp.float32)
        s = s - jnp.max(s, axis=-1, keepdims=True)
        p = jnp.exp(s)
        p = p * pl.reciprocal(jnp.sum(p, axis=-1, keepdims=True), approx=True)
        ctx_heads.append(jnp.dot(p.astype(jnp.bfloat16), v.astype(jnp.bfloat16),
                                 preferred_element_type=jnp.float32))   # (S, dh)
    ctx = jnp.concatenate(ctx_heads, axis=1)      # (S, H): concat heads on lanes

    # --- attention output projection: one (S,H)@(H,H) matmul ---
    attn = (jnp.dot(ctx.astype(jnp.bfloat16), wo_ref[...],
                    preferred_element_type=jnp.float32) + bo_ref[...])

    # --- residual + LayerNorm 1 ---
    h1 = _ln(attn + h, ln1g_ref[...], ln1b_ref[...], eps)

    # --- feed-forward (GELU) + residual + LayerNorm 2 ---
    inter = (jnp.dot(h1.astype(jnp.bfloat16), wi_ref[...],
                     preferred_element_type=jnp.float32) + bi_ref[...])
    inter = _gelu(inter)
    ffn = (jnp.dot(inter.astype(jnp.bfloat16), wo2_ref[...],
                   preferred_element_type=jnp.float32) + bo2_ref[...])
    h2 = _ln(ffn + h1, ln2g_ref[...], ln2b_ref[...], eps)

    hid_ref[...] = h2                             # carry to next layer step

    # --- last layer: fused FC head, lane-dense (S, 128) output ---
    @pl.when(l == num_layers - 1)
    def _():
        out_ref[...] = (jnp.dot(h2.astype(jnp.bfloat16), fcw_ref[...],
                                preferred_element_type=jnp.float32)
                        + fcb_ref[...]).astype(out_ref.dtype)


def bert_encoder(emb, params, *, num_heads):
    """Runs embedding-LN + all BERT layers + FC head in one pallas_call."""
    B, S, H = emb.shape
    L = params["wqkv"].shape[0]
    I = params["wi"].shape[2]
    NP = params["fc_w"].shape[1]                  # lane-padded label dim (128)
    dh = H // num_heads
    scale = 1.0 / math.sqrt(dh)

    def wspec(shape):                             # stacked per-layer weight
        return pl.BlockSpec((None,) + shape,
                            lambda b, l, _n=len(shape): (l,) + (0,) * _n)

    def cspec(shape):                             # constant (layer-invariant)
        return pl.BlockSpec(shape, lambda b, l, _n=len(shape): (0,) * _n)

    kernel = functools.partial(_encoder_kernel, num_heads=num_heads,
                               scale=scale, eps=1e-12)
    return pl.pallas_call(
        kernel,
        out_shape=jax.ShapeDtypeStruct((B, S, NP), jnp.float32),
        grid=(B, L),
        in_specs=[
            pl.BlockSpec((None, S, H), lambda b, l: (b, 0, 0)),   # embeddings
            cspec((1, H)), cspec((1, H)),                         # emb LN
            wspec((H, 3 * H)), wspec((1, 3 * H)),                 # QKV
            wspec((H, H)), wspec((1, H)),                         # attn out proj
            wspec((1, H)), wspec((1, H)),                         # LN1
            wspec((H, I)), wspec((1, I)),                         # FFN in
            wspec((I, H)), wspec((1, H)),                         # FFN out
            wspec((1, H)), wspec((1, H)),                         # LN2
            cspec((H, NP)), cspec((1, NP)),                       # FC head
        ],
        out_specs=pl.BlockSpec((None, S, NP), lambda b, l: (b, 0, 0)),
        scratch_shapes=[pltpu.VMEM((S, H), jnp.float32)],         # hidden carry
        compiler_params=pltpu.CompilerParams(
            dimension_semantics=("parallel", "arbitrary"),
            vmem_limit_bytes=48 * 1024 * 1024),
    )(emb, params["emb_ln_g"], params["emb_ln_b"],
      params["wqkv"], params["bqkv"], params["wo"], params["bo"],
      params["ln1_g"], params["ln1_b"],
      params["wi"], params["bi"], params["wo2"], params["bo2"],
      params["ln2_g"], params["ln2_b"],
      params["fc_w"], params["fc_b"])


# ----------------------------------------------------------------------------
# Synthetic BERT parameters (deterministic init, layer-stacked, bf16 weights)
# ----------------------------------------------------------------------------

def init_params(key, *, vocab=100, max_pos=64, hidden=32, num_layers=2,
                num_heads=2, intermediate=64, label_size=5):
    keys = iter(jax.random.split(key, 4 + 4 * num_layers))

    def w(shape, dtype=jnp.bfloat16):
        return (jax.random.normal(next(keys), shape, jnp.float32) * 0.02).astype(dtype)

    label_pad = 128 * ((label_size + 127) // 128)
    fc_w = jax.random.normal(next(keys), (hidden, label_size), jnp.float32) * 0.02
    fc_w = jnp.pad(fc_w, ((0, 0), (0, label_pad - label_size))).astype(jnp.bfloat16)
    fc_b = jnp.zeros((1, label_pad), jnp.float32)

    params = {
        "word_emb": (jax.random.normal(next(keys), (vocab, hidden), jnp.float32) * 0.02),
        "pos_emb": (jax.random.normal(next(keys), (max_pos, hidden), jnp.float32) * 0.02),
        "type_emb": (jax.random.normal(next(keys), (2, hidden), jnp.float32) * 0.02),
        "emb_ln_g": jnp.ones((1, hidden), jnp.float32),
        "emb_ln_b": jnp.zeros((1, hidden), jnp.float32),
        "fc_w": fc_w,
        "fc_b": fc_b,
        # layer-stacked weights (leading axis = layer), bf16 matmul operands
        "wqkv": jnp.stack([w((hidden, 3 * hidden)) for _ in range(num_layers)]),
        "bqkv": jnp.zeros((num_layers, 1, 3 * hidden), jnp.float32),
        "wo": jnp.stack([w((hidden, hidden)) for _ in range(num_layers)]),
        "bo": jnp.zeros((num_layers, 1, hidden), jnp.float32),
        "ln1_g": jnp.ones((num_layers, 1, hidden), jnp.float32),
        "ln1_b": jnp.zeros((num_layers, 1, hidden), jnp.float32),
        "wi": jnp.stack([w((hidden, intermediate)) for _ in range(num_layers)]),
        "bi": jnp.zeros((num_layers, 1, intermediate), jnp.float32),
        "wo2": jnp.stack([w((intermediate, hidden)) for _ in range(num_layers)]),
        "bo2": jnp.zeros((num_layers, 1, hidden), jnp.float32),
        "ln2_g": jnp.ones((num_layers, 1, hidden), jnp.float32),
        "ln2_b": jnp.zeros((num_layers, 1, hidden), jnp.float32),
    }
    return params


# ----------------------------------------------------------------------------
# Forward pass  (mirrors: x = bert(x)[0]; x = fc(x); x = dropout(x))
# ----------------------------------------------------------------------------

@functools.partial(jax.jit, static_argnames=("num_heads", "label_size"))
def bert_model_encoder_forward(params, x_ids, *, num_heads, label_size):
    B, S = x_ids.shape
    # Embedding lookup stays in plain JAX (gather glue); everything else is
    # one fused Pallas kernel.  token_type_ids assumed 0, positions 0..S-1.
    emb = (params["word_emb"][x_ids]
           + params["pos_emb"][:S][None, :, :]
           + params["type_emb"][0][None, None, :])
    logits = bert_encoder(emb, params, num_heads=num_heads)   # (B, S, 128) lane-dense
    # TODO(synk): nn.Dropout is identity in eval mode; no-op here.
    return logits[:, :, :label_size]


# ----------------------------------------------------------------------------

if __name__ == "__main__":
    key = jax.random.PRNGKey(0)
    pkey, xkey = jax.random.split(key)

    B, S = 2, 8
    NUM_HEADS = 2
    LABEL_SIZE = 5
    params = init_params(pkey, num_heads=NUM_HEADS, label_size=LABEL_SIZE)
    x = jax.random.randint(xkey, (B, S), 0, 100, dtype=jnp.int32)

    out = bert_model_encoder_forward(params, x, num_heads=NUM_HEADS,
                                     label_size=LABEL_SIZE)
    jax.block_until_ready(out)
    assert out.shape == (B, S, LABEL_SIZE)
    print("KERNEL_OK")
</pallas_src>

<mosaic_0001>
module attributes {stable_mosaic.version = 11 : i64} {
  func.func @_encoder_kernel(%arg0: i32, %arg1: i32, %arg2: memref<1x8x32xf32, #tpu.memory_space<vmem>>, %arg3: memref<1x32xf32, #tpu.memory_space<vmem>>, %arg4: memref<1x32xf32, #tpu.memory_space<vmem>>, %arg5: memref<1x32x96xbf16, #tpu.memory_space<vmem>>, %arg6: memref<1x1x96xf32, #tpu.memory_space<vmem>>, %arg7: memref<1x32x32xbf16, #tpu.memory_space<vmem>>, %arg8: memref<1x1x32xf32, #tpu.memory_space<vmem>>, %arg9: memref<1x1x32xf32, #tpu.memory_space<vmem>>, %arg10: memref<1x1x32xf32, #tpu.memory_space<vmem>>, %arg11: memref<1x32x64xbf16, #tpu.memory_space<vmem>>, %arg12: memref<1x1x64xf32, #tpu.memory_space<vmem>>, %arg13: memref<1x64x32xbf16, #tpu.memory_space<vmem>>, %arg14: memref<1x1x32xf32, #tpu.memory_space<vmem>>, %arg15: memref<1x1x32xf32, #tpu.memory_space<vmem>>, %arg16: memref<1x1x32xf32, #tpu.memory_space<vmem>>, %arg17: memref<32x128xbf16, #tpu.memory_space<vmem>>, %arg18: memref<1x128xf32, #tpu.memory_space<vmem>>, %arg19: memref<1x8x128xf32, #tpu.memory_space<vmem>>, %arg20: memref<8x32xf32, #tpu.memory_space<vmem>>) attributes {dimension_semantics = [#tpu.dimension_semantics<parallel>, #tpu.dimension_semantics<arbitrary>], iteration_bounds = array<i64: 2, 2>, scalar_prefetch = 0 : i64, scratch_operands = 1 : i64, tpu.core_type = #tpu.core_type<tc>, window_params = [{transform_indices = @transform_0, window_bounds = array<i64: 1, 8, 32>}, {pipeline_mode = #tpu.pipeline_mode<synchronous>, transform_indices = @transform_1, window_bounds = array<i64: 1, 32>}, {pipeline_mode = #tpu.pipeline_mode<synchronous>, transform_indices = @transform_2, window_bounds = array<i64: 1, 32>}, {transform_indices = @transform_3, window_bounds = array<i64: 1, 32, 96>}, {transform_indices = @transform_4, window_bounds = array<i64: 1, 1, 96>}, {transform_indices = @transform_5, window_bounds = array<i64: 1, 32, 32>}, {transform_indices = @transform_6, window_bounds = array<i64: 1, 1, 32>}, {transform_indices = @transform_7, window_bounds = array<i64: 1, 1, 32>}, {transform_indices = @transform_8, window_bounds = array<i64: 1, 1, 32>}, {transform_indices = @transform_9, window_bounds = array<i64: 1, 32, 64>}, {transform_indices = @transform_10, window_bounds = array<i64: 1, 1, 64>}, {transform_indices = @transform_11, window_bounds = array<i64: 1, 64, 32>}, {transform_indices = @transform_12, window_bounds = array<i64: 1, 1, 32>}, {transform_indices = @transform_13, window_bounds = array<i64: 1, 1, 32>}, {transform_indices = @transform_14, window_bounds = array<i64: 1, 1, 32>}, {pipeline_mode = #tpu.pipeline_mode<synchronous>, transform_indices = @transform_15, window_bounds = array<i64: 32, 128>}, {pipeline_mode = #tpu.pipeline_mode<synchronous>, transform_indices = @transform_16, window_bounds = array<i64: 1, 128>}, {transform_indices = @transform_17, window_bounds = array<i64: 1, 8, 128>}]} {
    %c0_i32 = arith.constant 0 : i32
    %0 = arith.cmpi eq, %arg1, %c0_i32 : i32
    %1 = arith.extui %0 : i1 to i32
    %c0_i32_0 = arith.constant 0 : i32
    %2 = arith.cmpi ne, %1, %c0_i32_0 : i32
    scf.if %2 {
      %c0_68 = arith.constant 0 : index
      %c0_69 = arith.constant 0 : index
      %c0_70 = arith.constant 0 : index
      %150 = vector.load %arg2[%c0_68, %c0_69, %c0_70] : memref<1x8x32xf32, #tpu.memory_space<vmem>>, vector<1x8x32xf32>
      %151 = vector.shape_cast %150 : vector<1x8x32xf32> to vector<8x32xf32>
      %c0_71 = arith.constant 0 : index
      %c0_72 = arith.constant 0 : index
      %152 = vector.load %arg3[%c0_71, %c0_72] : memref<1x32xf32, #tpu.memory_space<vmem>>, vector<1x32xf32>
      %c0_73 = arith.constant 0 : index
      %c0_74 = arith.constant 0 : index
      %153 = vector.load %arg4[%c0_73, %c0_74] : memref<1x32xf32, #tpu.memory_space<vmem>>, vector<1x32xf32>
      %cst_75 = arith.constant dense<0.000000e+00> : vector<8xf32>
      %154 = vector.multi_reduction <add>, %151, %cst_75 [1] : vector<8x32xf32> to vector<8xf32>
      %155 = vector.shape_cast %154 : vector<8xf32> to vector<8x1xf32>
      %cst_76 = arith.constant 3.200000e+01 : f32
      %156 = vector.broadcast %cst_76 : f32 to vector<8x1xf32>
      %157 = arith.divf %155, %156 : vector<8x1xf32>
      %158 = vector.broadcast %157 : vector<8x1xf32> to vector<8x32xf32>
      %159 = arith.subf %151, %158 : vector<8x32xf32>
      %160 = arith.mulf %159, %159 : vector<8x32xf32>
      %cst_77 = arith.constant dense<0.000000e+00> : vector<8xf32>
      %161 = vector.multi_reduction <add>, %160, %cst_77 [1] : vector<8x32xf32> to vector<8xf32>
      %162 = vector.shape_cast %161 : vector<8xf32> to vector<8x1xf32>
      %cst_78 = arith.constant 3.200000e+01 : f32
      %163 = vector.broadcast %cst_78 : f32 to vector<8x1xf32>
      %164 = arith.divf %162, %163 : vector<8x1xf32>
      %165 = vector.broadcast %157 : vector<8x1xf32> to vector<8x32xf32>
      %166 = arith.subf %151, %165 : vector<8x32xf32>
      %cst_79 = arith.constant 9.99999996E-13 : f32
      %167 = vector.broadcast %cst_79 : f32 to vector<8x1xf32>
      %168 = arith.addf %164, %167 : vector<8x1xf32>
      %169 = math.rsqrt %168 : vector<8x1xf32>
      %170 = vector.broadcast %169 : vector<8x1xf32> to vector<8x32xf32>
      %171 = arith.mulf %166, %170 : vector<8x32xf32>
      %172 = vector.broadcast %152 : vector<1x32xf32> to vector<8x32xf32>
      %173 = arith.mulf %171, %172 : vector<8x32xf32>
      %174 = vector.broadcast %153 : vector<1x32xf32> to vector<8x32xf32>
      %175 = arith.addf %173, %174 : vector<8x32xf32>
      %c0_80 = arith.constant 0 : index
      %c0_81 = arith.constant 0 : index
      %176 = vector.load %arg20[%c0_80, %c0_81] : memref<8x32xf32, #tpu.memory_space<vmem>>, vector<8x32xf32>
      tpu.vector_store %arg20[%c0_80, %c0_81], %175 {strides = array<i32>} : memref<8x32xf32, #tpu.memory_space<vmem>>, vector<8x32xf32>,
    } else {
    }
    %c0 = arith.constant 0 : index
    %c0_1 = arith.constant 0 : index
    %3 = vector.load %arg20[%c0, %c0_1] : memref<8x32xf32, #tpu.memory_space<vmem>>, vector<8x32xf32>
    %4 = arith.truncf %3 : vector<8x32xf32> to vector<8x32xbf16>
    %c0_2 = arith.constant 0 : index
    %c0_3 = arith.constant 0 : index
    %c0_4 = arith.constant 0 : index
    %5 = vector.load %arg5[%c0_2, %c0_3, %c0_4] : memref<1x32x96xbf16, #tpu.memory_space<vmem>>, vector<1x32x96xbf16>
    %6 = vector.shape_cast %5 : vector<1x32x96xbf16> to vector<32x96xbf16>
    %cst = arith.constant dense<0.000000e+00> : vector<8x96xf32>
    %7 = tpu.matmul %4, %6, %cst {dimension_numbers = #tpu.dot_dimension_numbers<[1], [0], [0], [1], [0, 0, 1, 1], [], []>} : vector<8x32xbf16>, vector<32x96xbf16>, vector<8x96xf32> -> vector<8x96xf32>
    %c0_5 = arith.constant 0 : index
    %c0_6 = arith.constant 0 : index
    %c0_7 = arith.constant 0 : index
    %8 = vector.load %arg6[%c0_5, %c0_6, %c0_7] : memref<1x1x96xf32, #tpu.memory_space<vmem>>, vector<1x1x96xf32>
    %9 = vector.shape_cast %8 : vector<1x1x96xf32> to vector<1x96xf32>
    %10 = vector.broadcast %9 : vector<1x96xf32> to vector<8x96xf32>
    %11 = arith.addf %7, %10 : vector<8x96xf32>
    %12 = vector.extract_strided_slice %11 {offsets = [0, 0], sizes = [8, 16], strides = [1, 1]} : vector<8x96xf32> to vector<8x16xf32>
    %cst_8 = arith.constant 2.500000e-01 : f32
    %13 = vector.broadcast %cst_8 : f32 to vector<8x16xf32>
    %14 = arith.mulf %12, %13 : vector<8x16xf32>
    %15 = vector.extract_strided_slice %11 {offsets = [0, 32], sizes = [8, 16], strides = [1, 1]} : vector<8x96xf32> to vector<8x16xf32>
    %16 = vector.extract_strided_slice %11 {offsets = [0, 64], sizes = [8, 16], strides = [1, 1]} : vector<8x96xf32> to vector<8x16xf32>
    %17 = arith.truncf %14 : vector<8x16xf32> to vector<8x16xbf16>
    %18 = arith.truncf %15 : vector<8x16xf32> to vector<8x16xbf16>
    %cst_9 = arith.constant dense<0.000000e+00> : vector<8x8xf32>
    %19 = tpu.matmul %17, %18, %cst_9 {dimension_numbers = #tpu.dot_dimension_numbers<[1], [1], [0], [0], [0, 0, 1, 0], [], []>} : vector<8x16xbf16>, vector<8x16xbf16>, vector<8x8xf32> -> vector<8x8xf32>
    %cst_10 = arith.constant dense<0xFF800000> : vector<8xf32>
    %20 = vector.multi_reduction <maximumf>, %19, %cst_10 [1] : vector<8x8xf32> to vector<8xf32>
    %21 = vector.shape_cast %20 : vector<8xf32> to vector<8x1xf32>
    %22 = vector.broadcast %21 : vector<8x1xf32> to vector<8x8xf32>
    %23 = arith.subf %19, %22 : vector<8x8xf32>
    %24 = math.exp %23 : vector<8x8xf32>
    %cst_11 = arith.constant dense<0.000000e+00> : vector<8xf32>
    %25 = vector.multi_reduction <add>, %24, %cst_11 [1] : vector<8x8xf32> to vector<8xf32>
    %26 = vector.shape_cast %25 : vector<8xf32> to vector<8x1xf32>
    %27 = tpu.reciprocal %26 {approx = true} : vector<8x1xf32> -> vector<8x1xf32>
    %28 = vector.broadcast %27 : vector<8x1xf32> to vector<8x8xf32>
    %29 = arith.mulf %24, %28 : vector<8x8xf32>
    %30 = arith.truncf %29 : vector<8x8xf32> to vector<8x8xbf16>
    %31 = arith.truncf %16 : vector<8x16xf32> to vector<8x16xbf16>
    %cst_12 = arith.constant dense<0.000000e+00> : vector<8x16xf32>
    %32 = tpu.matmul %30, %31, %cst_12 {dimension_numbers = #tpu.dot_dimension_numbers<[1], [0], [0], [1], [0, 0, 1, 1], [], []>} : vector<8x8xbf16>, vector<8x16xbf16>, vector<8x16xf32> -> vector<8x16xf32>
    %33 = vector.extract_strided_slice %11 {offsets = [0, 16], sizes = [8, 16], strides = [1, 1]} : vector<8x96xf32> to vector<8x16xf32>
    %cst_13 = arith.constant 2.500000e-01 : f32
    %34 = vector.broadcast %cst_13 : f32 to vector<8x16xf32>
    %35 = arith.mulf %33, %34 : vector<8x16xf32>
    %36 = vector.extract_strided_slice %11 {offsets = [0, 48], sizes = [8, 16], strides = [1, 1]} : vector<8x96xf32> to vector<8x16xf32>
    %37 = vector.extract_strided_slice %11 {offsets = [0, 80], sizes = [8, 16], strides = [1, 1]} : vector<8x96xf32> to vector<8x16xf32>
    %38 = arith.truncf %35 : vector<8x16xf32> to vector<8x16xbf16>
    %39 = arith.truncf %36 : vector<8x16xf32> to vector<8x16xbf16>
    %cst_14 = arith.constant dense<0.000000e+00> : vector<8x8xf32>
    %40 = tpu.matmul %38, %39, %cst_14 {dimension_numbers = #tpu.dot_dimension_numbers<[1], [1], [0], [0], [0, 0, 1, 0], [], []>} : vector<8x16xbf16>, vector<8x16xbf16>, vector<8x8xf32> -> vector<8x8xf32>
    %cst_15 = arith.constant dense<0xFF800000> : vector<8xf32>
    %41 = vector.multi_reduction <maximumf>, %40, %cst_15 [1] : vector<8x8xf32> to vector<8xf32>
    %42 = vector.shape_cast %41 : vector<8xf32> to vector<8x1xf32>
    %43 = vector.broadcast %42 : vector<8x1xf32> to vector<8x8xf32>
    %44 = arith.subf %40, %43 : vector<8x8xf32>
    %45 = math.exp %44 : vector<8x8xf32>
    %cst_16 = arith.constant dense<0.000000e+00> : vector<8xf32>
    %46 = vector.multi_reduction <add>, %45, %cst_16 [1] : vector<8x8xf32> to vector<8xf32>
    %47 = vector.shape_cast %46 : vector<8xf32> to vector<8x1xf32>
    %48 = tpu.reciprocal %47 {approx = true} : vector<8x1xf32> -> vector<8x1xf32>
    %49 = vector.broadcast %48 : vector<8x1xf32> to vector<8x8xf32>
    %50 = arith.mulf %45, %49 : vector<8x8xf32>
    %51 = arith.truncf %50 : vector<8x8xf32> to vector<8x8xbf16>
    %52 = arith.truncf %37 : vector<8x16xf32> to vector<8x16xbf16>
    %cst_17 = arith.constant dense<0.000000e+00> : vector<8x16xf32>
    %53 = tpu.matmul %51, %52, %cst_17 {dimension_numbers = #tpu.dot_dimension_numbers<[1], [0], [0], [1], [0, 0, 1, 1], [], []>} : vector<8x8xbf16>, vector<8x16xbf16>, vector<8x16xf32> -> vector<8x16xf32>
    %54 = tpu.concatenate %32, %53 in 1 : vector<8x16xf32>, vector<8x16xf32> -> vector<8x32xf32>
    %55 = arith.truncf %54 : vector<8x32xf32> to vector<8x32xbf16>
    %c0_18 = arith.constant 0 : index
    %c0_19 = arith.constant 0 : index
    %c0_20 = arith.constant 0 : index
    %56 = vector.load %arg7[%c0_18, %c0_19, %c0_20] : memref<1x32x32xbf16, #tpu.memory_space<vmem>>, vector<1x32x32xbf16>
    %57 = vector.shape_cast %56 : vector<1x32x32xbf16> to vector<32x32xbf16>
    %cst_21 = arith.constant dense<0.000000e+00> : vector<8x32xf32>
    %58 = tpu.matmul %55, %57, %cst_21 {dimension_numbers = #tpu.dot_dimension_numbers<[1], [0], [0], [1], [0, 0, 1, 1], [], []>} : vector<8x32xbf16>, vector<32x32xbf16>, vector<8x32xf32> -> vector<8x32xf32>
    %c0_22 = arith.constant 0 : index
    %c0_23 = arith.constant 0 : index
    %c0_24 = arith.constant 0 : index
    %59 = vector.load %arg8[%c0_22, %c0_23, %c0_24] : memref<1x1x32xf32, #tpu.memory_space<vmem>>, vector<1x1x32xf32>
    %60 = vector.shape_cast %59 : vector<1x1x32xf32> to vector<1x32xf32>
    %61 = vector.broadcast %60 : vector<1x32xf32> to vector<8x32xf32>
    %62 = arith.addf %58, %61 : vector<8x32xf32>
    %63 = arith.addf %62, %3 : vector<8x32xf32>
    %c0_25 = arith.constant 0 : index
    %c0_26 = arith.constant 0 : index
    %c0_27 = arith.constant 0 : index
    %64 = vector.load %arg9[%c0_25, %c0_26, %c0_27] : memref<1x1x32xf32, #tpu.memory_space<vmem>>, vector<1x1x32xf32>
    %65 = vector.shape_cast %64 : vector<1x1x32xf32> to vector<1x32xf32>
    %c0_28 = arith.constant 0 : index
    %c0_29 = arith.constant 0 : index
    %c0_30 = arith.constant 0 : index
    %66 = vector.load %arg10[%c0_28, %c0_29, %c0_30] : memref<1x1x32xf32, #tpu.memory_space<vmem>>, vector<1x1x32xf32>
    %67 = vector.shape_cast %66 : vector<1x1x32xf32> to vector<1x32xf32>
    %cst_31 = arith.constant dense<0.000000e+00> : vector<8xf32>
    %68 = vector.multi_reduction <add>, %63, %cst_31 [1] : vector<8x32xf32> to vector<8xf32>
    %69 = vector.shape_cast %68 : vector<8xf32> to vector<8x1xf32>
    %cst_32 = arith.constant 3.200000e+01 : f32
    %70 = vector.broadcast %cst_32 : f32 to vector<8x1xf32>
    %71 = arith.divf %69, %70 : vector<8x1xf32>
    %72 = vector.broadcast %71 : vector<8x1xf32> to vector<8x32xf32>
    %73 = arith.subf %63, %72 : vector<8x32xf32>
    %74 = arith.mulf %73, %73 : vector<8x32xf32>
    %cst_33 = arith.constant dense<0.000000e+00> : vector<8xf32>
    %75 = vector.multi_reduction <add>, %74, %cst_33 [1] : vector<8x32xf32> to vector<8xf32>
    %76 = vector.shape_cast %75 : vector<8xf32> to vector<8x1xf32>
    %cst_34 = arith.constant 3.200000e+01 : f32
    %77 = vector.broadcast %cst_34 : f32 to vector<8x1xf32>
    %78 = arith.divf %76, %77 : vector<8x1xf32>
    %79 = vector.broadcast %71 : vector<8x1xf32> to vector<8x32xf32>
    %80 = arith.subf %63, %79 : vector<8x32xf32>
    %cst_35 = arith.constant 9.99999996E-13 : f32
    %81 = vector.broadcast %cst_35 : f32 to vector<8x1xf32>
    %82 = arith.addf %78, %81 : vector<8x1xf32>
    %83 = math.rsqrt %82 : vector<8x1xf32>
    %84 = vector.broadcast %83 : vector<8x1xf32> to vector<8x32xf32>
    %85 = arith.mulf %80, %84 : vector<8x32xf32>
    %86 = vector.broadcast %65 : vector<1x32xf32> to vector<8x32xf32>
    %87 = arith.mulf %85, %86 : vector<8x32xf32>
    %88 = vector.broadcast %67 : vector<1x32xf32> to vector<8x32xf32>
    %89 = arith.addf %87, %88 : vector<8x32xf32>
    %90 = arith.truncf %89 : vector<8x32xf32> to vector<8x32xbf16>
    %c0_36 = arith.constant 0 : index
    %c0_37 = arith.constant 0 : index
    %c0_38 = arith.constant 0 : index
    %91 = vector.load %arg11[%c0_36, %c0_37, %c0_38] : memref<1x32x64xbf16, #tpu.memory_space<vmem>>, vector<1x32x64xbf16>
    %92 = vector.shape_cast %91 : vector<1x32x64xbf16> to vector<32x64xbf16>
    %cst_39 = arith.constant dense<0.000000e+00> : vector<8x64xf32>
    %93 = tpu.matmul %90, %92, %cst_39 {dimension_numbers = #tpu.dot_dimension_numbers<[1], [0], [0], [1], [0, 0, 1, 1], [], []>} : vector<8x32xbf16>, vector<32x64xbf16>, vector<8x64xf32> -> vector<8x64xf32>
    %c0_40 = arith.constant 0 : index
    %c0_41 = arith.constant 0 : index
    %c0_42 = arith.constant 0 : index
    %94 = vector.load %arg12[%c0_40, %c0_41, %c0_42] : memref<1x1x64xf32, #tpu.memory_space<vmem>>, vector<1x1x64xf32>
    %95 = vector.shape_cast %94 : vector<1x1x64xf32> to vector<1x64xf32>
    %96 = vector.broadcast %95 : vector<1x64xf32> to vector<8x64xf32>
    %97 = arith.addf %93, %96 : vector<8x64xf32>
    %cst_43 = arith.constant 5.000000e-01 : f32
    %98 = vector.broadcast %cst_43 : f32 to vector<8x64xf32>
    %99 = arith.mulf %98, %97 : vector<8x64xf32>
    %cst_44 = arith.constant 4.471500e-02 : f32
    %100 = vector.broadcast %cst_44 : f32 to vector<8x64xf32>
    %101 = arith.mulf %100, %97 : vector<8x64xf32>
    %102 = arith.mulf %101, %97 : vector<8x64xf32>
    %103 = arith.mulf %102, %97 : vector<8x64xf32>
    %104 = arith.addf %97, %103 : vector<8x64xf32>
    %cst_45 = arith.constant 0.797884583 : f32
    %105 = vector.broadcast %cst_45 : f32 to vector<8x64xf32>
    %106 = arith.mulf %105, %104 : vector<8x64xf32>
    %107 = math.tanh %106 : vector<8x64xf32>
    %cst_46 = arith.constant 1.000000e+00 : f32
    %108 = vector.broadcast %cst_46 : f32 to vector<8x64xf32>
    %109 = arith.addf %108, %107 : vector<8x64xf32>
    %110 = arith.mulf %99, %109 : vector<8x64xf32>
    %111 = arith.truncf %110 : vector<8x64xf32> to vector<8x64xbf16>
    %c0_47 = arith.constant 0 : index
    %c0_48 = arith.constant 0 : index
    %c0_49 = arith.constant 0 : index
    %112 = vector.load %arg13[%c0_47, %c0_48, %c0_49] : memref<1x64x32xbf16, #tpu.memory_space<vmem>>, vector<1x64x32xbf16>
    %113 = vector.shape_cast %112 : vector<1x64x32xbf16> to vector<64x32xbf16>
    %cst_50 = arith.constant dense<0.000000e+00> : vector<8x32xf32>
    %114 = tpu.matmul %111, %113, %cst_50 {dimension_numbers = #tpu.dot_dimension_numbers<[1], [0], [0], [1], [0, 0, 1, 1], [], []>} : vector<8x64xbf16>, vector<64x32xbf16>, vector<8x32xf32> -> vector<8x32xf32>
    %c0_51 = arith.constant 0 : index
    %c0_52 = arith.constant 0 : index
    %c0_53 = arith.constant 0 : index
    %115 = vector.load %arg14[%c0_51, %c0_52, %c0_53] : memref<1x1x32xf32, #tpu.memory_space<vmem>>, vector<1x1x32xf32>
    %116 = vector.shape_cast %115 : vector<1x1x32xf32> to vector<1x32xf32>
    %117 = vector.broadcast %116 : vector<1x32xf32> to vector<8x32xf32>
    %118 = arith.addf %114, %117 : vector<8x32xf32>
    %119 = arith.addf %118, %89 : vector<8x32xf32>
    %c0_54 = arith.constant 0 : index
    %c0_55 = arith.constant 0 : index
    %c0_56 = arith.constant 0 : index
    %120 = vector.load %arg15[%c0_54, %c0_55, %c0_56] : memref<1x1x32xf32, #tpu.memory_space<vmem>>, vector<1x1x32xf32>
    %121 = vector.shape_cast %120 : vector<1x1x32xf32> to vector<1x32xf32>
    %c0_57 = arith.constant 0 : index
    %c0_58 = arith.constant 0 : index
    %c0_59 = arith.constant 0 : index
    %122 = vector.load %arg16[%c0_57, %c0_58, %c0_59] : memref<1x1x32xf32, #tpu.memory_space<vmem>>, vector<1x1x32xf32>
    %123 = vector.shape_cast %122 : vector<1x1x32xf32> to vector<1x32xf32>
    %cst_60 = arith.constant dense<0.000000e+00> : vector<8xf32>
    %124 = vector.multi_reduction <add>, %119, %cst_60 [1] : vector<8x32xf32> to vector<8xf32>
    %125 = vector.shape_cast %124 : vector<8xf32> to vector<8x1xf32>
    %cst_61 = arith.constant 3.200000e+01 : f32
    %126 = vector.broadcast %cst_61 : f32 to vector<8x1xf32>
    %127 = arith.divf %125, %126 : vector<8x1xf32>
    %128 = vector.broadcast %127 : vector<8x1xf32> to vector<8x32xf32>
    %129 = arith.subf %119, %128 : vector<8x32xf32>
    %130 = arith.mulf %129, %129 : vector<8x32xf32>
    %cst_62 = arith.constant dense<0.000000e+00> : vector<8xf32>
    %131 = vector.multi_reduction <add>, %130, %cst_62 [1] : vector<8x32xf32> to vector<8xf32>
    %132 = vector.shape_cast %131 : vector<8xf32> to vector<8x1xf32>
    %cst_63 = arith.constant 3.200000e+01 : f32
    %133 = vector.broadcast %cst_63 : f32 to vector<8x1xf32>
    %134 = arith.divf %132, %133 : vector<8x1xf32>
    %135 = vector.broadcast %127 : vector<8x1xf32> to vector<8x32xf32>
    %136 = arith.subf %119, %135 : vector<8x32xf32>
    %cst_64 = arith.constant 9.99999996E-13 : f32
    %137 = vector.broadcast %cst_64 : f32 to vector<8x1xf32>
    %138 = arith.addf %134, %137 : vector<8x1xf32>
    %139 = math.rsqrt %138 : vector<8x1xf32>
    %140 = vector.broadcast %139 : vector<8x1xf32> to vector<8x32xf32>
    %141 = arith.mulf %136, %140 : vector<8x32xf32>
    %142 = vector.broadcast %121 : vector<1x32xf32> to vector<8x32xf32>
    %143 = arith.mulf %141, %142 : vector<8x32xf32>
    %144 = vector.broadcast %123 : vector<1x32xf32> to vector<8x32xf32>
    %145 = arith.addf %143, %144 : vector<8x32xf32>
    %c0_65 = arith.constant 0 : index
    %c0_66 = arith.constant 0 : index
    %146 = vector.load %arg20[%c0_65, %c0_66] : memref<8x32xf32, #tpu.memory_space<vmem>>, vector<8x32xf32>
    tpu.vector_store %arg20[%c0_65, %c0_66], %145 {strides = array<i32>} : memref<8x32xf32, #tpu.memory_space<vmem>>, vector<8x32xf32>,
    %c1_i32 = arith.constant 1 : i32
    %147 = arith.cmpi eq, %arg1, %c1_i32 : i32
    %148 = arith.extui %147 : i1 to i32
    %c0_i32_67 = arith.constant 0 : i32
    %149 = arith.cmpi ne, %148, %c0_i32_67 : i32
    scf.if %149 {
      %150 = arith.truncf %145 : vector<8x32xf32> to vector<8x32xbf16>
      %c0_68 = arith.constant 0 : index
      %c0_69 = arith.constant 0 : index
      %151 = vector.load %arg17[%c0_68, %c0_69] : memref<32x128xbf16, #tpu.memory_space<vmem>>, vector<32x128xbf16>
      %cst_70 = arith.constant dense<0.000000e+00> : vector<8x128xf32>
      %152 = tpu.matmul %150, %151, %cst_70 {dimension_numbers = #tpu.dot_dimension_numbers<[1], [0], [0], [1], [0, 0, 1, 1], [], []>} : vector<8x32xbf16>, vector<32x128xbf16>, vector<8x128xf32> -> vector<8x128xf32>
      %c0_71 = arith.constant 0 : index
      %c0_72 = arith.constant 0 : index
      %153 = vector.load %arg18[%c0_71, %c0_72] : memref<1x128xf32, #tpu.memory_space<vmem>>, vector<1x128xf32>
      %154 = vector.broadcast %153 : vector<1x128xf32> to vector<8x128xf32>
      %155 = arith.addf %152, %154 : vector<8x128xf32>
      %c0_73 = arith.constant 0 : index
      %c0_74 = arith.constant 0 : index
      %c0_75 = arith.constant 0 : index
      %156 = vector.load %arg19[%c0_73, %c0_74, %c0_75] : memref<1x8x128xf32, #tpu.memory_space<vmem>>, vector<1x8x128xf32>
      %157 = vector.shape_cast %156 : vector<1x8x128xf32> to vector<8x128xf32>
      %158 = vector.shape_cast %155 : vector<8x128xf32> to vector<1x8x128xf32>
      tpu.vector_store %arg19[%c0_73, %c0_74, %c0_75], %158 {strides = array<i32>} : memref<1x8x128xf32, #tpu.memory_space<vmem>>, vector<1x8x128xf32>,
    } else {
    }
    return
  }
  func.func @transform_0(%arg0: i32, %arg1: i32) -> (i32, i32, i32) {
    %c0_i32 = arith.constant 0 : i32
    %c0_i32_0 = arith.constant 0 : i32
    %c0_i32_1 = arith.constant 0 : i32
    return %arg0, %c0_i32, %c0_i32_0 : i32, i32, i32
  }
  func.func @transform_1(%arg0: i32, %arg1: i32) -> (i32, i32) {
    %c0_i32 = arith.constant 0 : i32
    %c0_i32_0 = arith.constant 0 : i32
    %c0_i32_1 = arith.constant 0 : i32
    return %c0_i32, %c0_i32_0 : i32, i32
  }
  func.func @transform_2(%arg0: i32, %arg1: i32) -> (i32, i32) {
    %c0_i32 = arith.constant 0 : i32
    %c0_i32_0 = arith.constant 0 : i32
    %c0_i32_1 = arith.constant 0 : i32
    return %c0_i32, %c0_i32_0 : i32, i32
  }
  func.func @transform_3(%arg0: i32, %arg1: i32) -> (i32, i32, i32) {
    %c0_i32 = arith.constant 0 : i32
    %c0_i32_0 = arith.constant 0 : i32
    %c0_i32_1 = arith.constant 0 : i32
    return %arg1, %c0_i32, %c0_i32_0 : i32, i32, i32
  }
  func.func @transform_4(%arg0: i32, %arg1: i32) -> (i32, i32, i32) {
    %c0_i32 = arith.constant 0 : i32
    %c0_i32_0 = arith.constant 0 : i32
    %c0_i32_1 = arith.constant 0 : i32
    return %arg1, %c0_i32, %c0_i32_0 : i32, i32, i32
  }
  func.func @transform_5(%arg0: i32, %arg1: i32) -> (i32, i32, i32) {
    %c0_i32 = arith.constant 0 : i32
    %c0_i32_0 = arith.constant 0 : i32
    %c0_i32_1 = arith.constant 0 : i32
    return %arg1, %c0_i32, %c0_i32_0 : i32, i32, i32
  }
  func.func @transform_6(%arg0: i32, %arg1: i32) -> (i32, i32, i32) {
    %c0_i32 = arith.constant 0 : i32
    %c0_i32_0 = arith.constant 0 : i32
    %c0_i32_1 = arith.constant 0 : i32
    return %arg1, %c0_i32, %c0_i32_0 : i32, i32, i32
  }
  func.func @transform_7(%arg0: i32, %arg1: i32) -> (i32, i32, i32) {
    %c0_i32 = arith.constant 0 : i32
    %c0_i32_0 = arith.constant 0 : i32
    %c0_i32_1 = arith.constant 0 : i32
    return %arg1, %c0_i32, %c0_i32_0 : i32, i32, i32
  }
  func.func @transform_8(%arg0: i32, %arg1: i32) -> (i32, i32, i32) {
    %c0_i32 = arith.constant 0 : i32
    %c0_i32_0 = arith.constant 0 : i32
    %c0_i32_1 = arith.constant 0 : i32
    return %arg1, %c0_i32, %c0_i32_0 : i32, i32, i32
  }
  func.func @transform_9(%arg0: i32, %arg1: i32) -> (i32, i32, i32) {
    %c0_i32 = arith.constant 0 : i32
    %c0_i32_0 = arith.constant 0 : i32
    %c0_i32_1 = arith.constant 0 : i32
    return %arg1, %c0_i32, %c0_i32_0 : i32, i32, i32
  }
  func.func @transform_10(%arg0: i32, %arg1: i32) -> (i32, i32, i32) {
    %c0_i32 = arith.constant 0 : i32
    %c0_i32_0 = arith.constant 0 : i32
    %c0_i32_1 = arith.constant 0 : i32
    return %arg1, %c0_i32, %c0_i32_0 : i32, i32, i32
  }
  func.func @transform_11(%arg0: i32, %arg1: i32) -> (i32, i32, i32) {
    %c0_i32 = arith.constant 0 : i32
    %c0_i32_0 = arith.constant 0 : i32
    %c0_i32_1 = arith.constant 0 : i32
    return %arg1, %c0_i32, %c0_i32_0 : i32, i32, i32
  }
  func.func @transform_12(%arg0: i32, %arg1: i32) -> (i32, i32, i32) {
    %c0_i32 = arith.constant 0 : i32
    %c0_i32_0 = arith.constant 0 : i32
    %c0_i32_1 = arith.constant 0 : i32
    return %arg1, %c0_i32, %c0_i32_0 : i32, i32, i32
  }
  func.func @transform_13(%arg0: i32, %arg1: i32) -> (i32, i32, i32) {
    %c0_i32 = arith.constant 0 : i32
    %c0_i32_0 = arith.constant 0 : i32
    %c0_i32_1 = arith.constant 0 : i32
    return %arg1, %c0_i32, %c0_i32_0 : i32, i32, i32
  }
  func.func @transform_14(%arg0: i32, %arg1: i32) -> (i32, i32, i32) {
    %c0_i32 = arith.constant 0 : i32
    %c0_i32_0 = arith.constant 0 : i32
    %c0_i32_1 = arith.constant 0 : i32
    return %arg1, %c0_i32, %c0_i32_0 : i32, i32, i32
  }
  func.func @transform_15(%arg0: i32, %arg1: i32) -> (i32, i32) {
    %c0_i32 = arith.constant 0 : i32
    %c0_i32_0 = arith.constant 0 : i32
    %c0_i32_1 = arith.constant 0 : i32
    return %c0_i32, %c0_i32_0 : i32, i32
  }
  func.func @transform_16(%arg0: i32, %arg1: i32) -> (i32, i32) {
    %c0_i32 = arith.constant 0 : i32
    %c0_i32_0 = arith.constant 0 : i32
    %c0_i32_1 = arith.constant 0 : i32
    return %c0_i32, %c0_i32_0 : i32, i32
  }
  func.func @transform_17(%arg0: i32, %arg1: i32) -> (i32, i32, i32) {
    %c0_i32 = arith.constant 0 : i32
    %c0_i32_0 = arith.constant 0 : i32
    %c0_i32_1 = arith.constant 0 : i32
    return %arg0, %c0_i32, %c0_i32_0 : i32, i32, i32
  }
}

</mosaic_0001>

<llo_original>
// kernel: bert_model_encoder_forward.1
$region0: #{bert_model_encoder_forward.1}
  #allocation0 [shape = 'u32[]', space=smem, size = 0x4, offset = 0x4, fixed_abs, tag = 'smem constant byte address 0x4 - core index']
  #allocation1 [shape = 'u32[144,128]{1,0:T(1,128)}', space=vmem, size = 0x12000, scoped, tag = 'internal scratch']
  #allocation2 [shape = 'f32[8,32]{1,0:T(8,128)}', space=vmem, size = 0x1000, scoped, tag = 'scratch operand']
  %s0 = inlined_call_operand.vmem [shape: f32[2,8,32], index: 0, kind: input, shape index: {}]
  %s1 = inlined_call_operand.vmem [shape: f32[1,32], index: 1, kind: input, shape index: {}]
  %s2 = inlined_call_operand.vmem [shape: f32[1,32], index: 2, kind: input, shape index: {}]
  %s3 = inlined_call_operand.vmem [shape: bf16[2,32,96], index: 3, kind: input, shape index: {}]
  %s4 = inlined_call_operand.vmem [shape: f32[2,1,96], index: 4, kind: input, shape index: {}]
  %s5 = inlined_call_operand.vmem [shape: bf16[2,32,32], index: 5, kind: input, shape index: {}]
  %s6 = inlined_call_operand.vmem [shape: f32[2,1,32], index: 6, kind: input, shape index: {}]
  %s7 = inlined_call_operand.vmem [shape: f32[2,1,32], index: 7, kind: input, shape index: {}]
  %s8 = inlined_call_operand.vmem [shape: f32[2,1,32], index: 8, kind: input, shape index: {}]
  %s9 = inlined_call_operand.vmem [shape: bf16[2,32,64], index: 9, kind: input, shape index: {}]
  %s10 = inlined_call_operand.vmem [shape: f32[2,1,64], index: 10, kind: input, shape index: {}]
  %s11 = inlined_call_operand.vmem [shape: bf16[2,64,32], index: 11, kind: input, shape index: {}]
  %s12 = inlined_call_operand.vmem [shape: f32[2,1,32], index: 12, kind: input, shape index: {}]
  %s13 = inlined_call_operand.vmem [shape: f32[2,1,32], index: 13, kind: input, shape index: {}]
  %s14 = inlined_call_operand.vmem [shape: f32[2,1,32], index: 14, kind: input, shape index: {}]
  %s15 = inlined_call_operand.vmem [shape: bf16[32,128], index: 15, kind: input, shape index: {}]
  %s16 = inlined_call_operand.vmem [shape: f32[1,128], index: 16, kind: input, shape index: {}]
  %s17 = inlined_call_operand.vmem [shape: f32[2,8,128], index: 17, kind: output, shape index: {}]
  %s18 = sld [smem:[#allocation0]]
  $region109: #{bert_model_encoder_forward.1} parent=0
    _
  %s20 = ssub.s32 1, %s18
  %s21 = scalar_select 0, %s20, %s18
  loop: start=0, step=1, limit=6
  $region2: #{bert_model_encoder_forward.1} parent=0 // loop_pre_header
    _
  $region3: #{bert_model_encoder_forward.1} parent=0 // loop_header
    %s23 = sphi 0, %s27
    %p24 = scmp.ge.s32.totalorder %s23, 6
    %s30 = sphi 0, %s42
    %s31 = sphi 0, %s38
    %s32 = sphi 0, %s30
    %s33 = sphi 0, %s31
    %s34 = sphi 0, %s32
    %s35 = sphi 0, %s33
    %s45 = sphi 0, %s47
    %s48 = sphi 0, %s45
    %s49 = sphi 0, %s48
    %s65 = sphi 0, %s49
    %s69 = sphi 0, %s69
    %s71 = sphi 0, %s69
    %s72 = sphi 0, %s71
    %s86 = sphi 0, %s72
    %s90 = sphi 0, %s90
    %s92 = sphi 0, %s90
    %s93 = sphi 0, %s92
    %s107 = sphi 0, %s93
    %s113 = sphi 0, %s115
    %s116 = sphi 0, %s113
    %s117 = sphi 0, %s116
    %s133 = sphi 0, %s117
    %s139 = sphi 0, %s141
    %s142 = sphi 0, %s139
    %s143 = sphi 0, %s142
    %s159 = sphi 0, %s143
    %s165 = sphi 0, %s167
    %s168 = sphi 0, %s165
    %s169 = sphi 0, %s168
    %s185 = sphi 0, %s169
    %s191 = sphi 0, %s193
    %s194 = sphi 0, %s191
    %s195 = sphi 0, %s194
    %s211 = sphi 0, %s195
    %s217 = sphi 0, %s219
    %s220 = sphi 0, %s217
    %s221 = sphi 0, %s220
    %s237 = sphi 0, %s221
    %s243 = sphi 0, %s245
    %s246 = sphi 0, %s243
    %s247 = sphi 0, %s246
    %s263 = sphi 0, %s247
    %s269 = sphi 0, %s271
    %s272 = sphi 0, %s269
    %s273 = sphi 0, %s272
    %s289 = sphi 0, %s273
    %s295 = sphi 0, %s297
    %s298 = sphi 0, %s295
    %s299 = sphi 0, %s298
    %s315 = sphi 0, %s299
    %s321 = sphi 0, %s323
    %s324 = sphi 0, %s321
    %s325 = sphi 0, %s324
    %s341 = sphi 0, %s325
    %s347 = sphi 0, %s349
    %s350 = sphi 0, %s347
    %s351 = sphi 0, %s350
    %s367 = sphi 0, %s351
    %s373 = sphi 0, %s375
    %s376 = sphi 0, %s373
    %s377 = sphi 0, %s376
    %s393 = sphi 0, %s377
    %s399 = sphi 0, %s401
    %s402 = sphi 0, %s399
    %s403 = sphi 0, %s402
    %s419 = sphi 0, %s403
    %s423 = sphi 0, %s423
    %s425 = sphi 0, %s423
    %s426 = sphi 0, %s425
    %s440 = sphi 0, %s426
    %s444 = sphi 0, %s444
    %s446 = sphi 0, %s444
    %s447 = sphi 0, %s446
    %s461 = sphi 0, %s447
    %s467 = sphi 0, %s469
    %s470 = sphi 0, %s467
    %s471 = sphi 0, %s470
    %s487 = sphi 0, %s471
  $region4: #{bert_model_encoder_forward.1} parent=0 // loop_header_branch
    %26 = sbr.rel (%p24) target = $region8
  $region5: #{bert_model_encoder_forward.1} parent=0 // loop_body
    %s28 = ssub.s32 %s23, 1
    %s29 = ssub.s32 %s23, 2
    %s36 = sadd.s32 1, %s31
    %p37 = scmp.ge.s32.totalorder %s36, 2
    %s38 = scalar_select %p37, 0, %s36
    %s39 = sadd.s32 1, %s30
    %s40 = scalar_select %p37, %s39, %s30
    %p41 = scmp.ge.s32.totalorder %s40, 2
    %s42 = scalar_select %p41, 0, %s40
    %s43 = ssub.s32 %s30, %s42
    %p44 = scmp.eq.s32.totalorder %s43, 0
    %s46 = sadd.s32 %s45, 1
    %s47 = scalar_select %p44, %s45, %s46
    %p50 = pneg %p44
    %p51 = scmp.eq.s32.totalorder %s23, 3
    %p52 = por %p50, %p51
    %p53 = scmp.ne.s32.totalorder %s45, %s48
    %p54 = scmp.eq.s32.totalorder %s23, 0
    %p55 = por %p53, %p54
    %p56 = scmp.ne.s32.totalorder %s45, %s48
    %p57 = scmp.eq.s32.totalorder %s28, 3
    %p58 = por %p56, %p57
    %p59 = scmp.ne.s32.totalorder %s48, %s49
    %p60 = scmp.eq.s32.totalorder %s28, 0
    %p61 = por %p59, %p60
    %p62 = scmp.ne.s32.totalorder %s48, %s49
    %p63 = scmp.eq.s32.totalorder %s29, 3
    %p64 = por %p62, %p63
    %p66 = scmp.ne.s32.totalorder %s49, %s65
    %p67 = scmp.eq.s32.totalorder %s29, 0
    %p68 = por %p66, %p67
    %s70 = sadd.s32 %s69, 1
    %p73 = scmp.eq.s32.totalorder %s23, 3
    %p74 = scmp.ne.s32.totalorder %s69, %s71
    %p75 = scmp.eq.s32.totalorder %s23, 0
    %p76 = por %p74, %p75
    %p77 = scmp.ne.s32.totalorder %s69, %s71
    %p78 = scmp.eq.s32.totalorder %s28, 3
    %p79 = por %p77, %p78
    %p80 = scmp.ne.s32.totalorder %s71, %s72
    %p81 = scmp.eq.s32.totalorder %s28, 0
    %p82 = por %p80, %p81
    %p83 = scmp.ne.s32.totalorder %s71, %s72
    %p84 = scmp.eq.s32.totalorder %s29, 3
    %p85 = por %p83, %p84
    %p87 = scmp.ne.s32.totalorder %s72, %s86
    %p88 = scmp.eq.s32.totalorder %s29, 0
    %p89 = por %p87, %p88
    %s91 = sadd.s32 %s90, 1
    %p94 = scmp.eq.s32.totalorder %s23, 3
    %p95 = scmp.ne.s32.totalorder %s90, %s92
    %p96 = scmp.eq.s32.totalorder %s23, 0
    %p97 = por %p95, %p96
    %p98 = scmp.ne.s32.totalorder %s90, %s92
    %p99 = scmp.eq.s32.totalorder %s28, 3
    %p100 = por %p98, %p99
    %p101 = scmp.ne.s32.totalorder %s92, %s93
    %p102 = scmp.eq.s32.totalorder %s28, 0
    %p103 = por %p101, %p102
    %p104 = scmp.ne.s32.totalorder %s92, %s93
    %p105 = scmp.eq.s32.totalorder %s29, 3
    %p106 = por %p104, %p105
    %p108 = scmp.ne.s32.totalorder %s93, %s107
    %p109 = scmp.eq.s32.totalorder %s29, 0
    %p110 = por %p108, %p109
    %s111 = ssub.s32 %s31, %s38
    %p112 = scmp.eq.s32.totalorder %s111, 0
    %s114 = sadd.s32 %s113, 1
    %s115 = scalar_select %p112, %s113, %s114
    %p118 = pneg %p112
    %p119 = scmp.eq.s32.totalorder %s23, 3
    %p120 = por %p118, %p119
    %p121 = scmp.ne.s32.totalorder %s113, %s116
    %p122 = scmp.eq.s32.totalorder %s23, 0
    %p123 = por %p121, %p122
    %p124 = scmp.ne.s32.totalorder %s113, %s116
    %p125 = scmp.eq.s32.totalorder %s28, 3
    %p126 = por %p124, %p125
    %p127 = scmp.ne.s32.totalorder %s116, %s117
    %p128 = scmp.eq.s32.totalorder %s28, 0
    %p129 = por %p127, %p128
    %p130 = scmp.ne.s32.totalorder %s116, %s117
    %p131 = scmp.eq.s32.totalorder %s29, 3
    %p132 = por %p130, %p131
    %p134 = scmp.ne.s32.totalorder %s117, %s133
    %p135 = scmp.eq.s32.totalorder %s29, 0
    %p136 = por %p134, %p135
    %s137 = ssub.s32 %s31, %s38
    %p138 = scmp.eq.s32.totalorder %s137, 0
    %s140 = sadd.s32 %s139, 1
    %s141 = scalar_select %p138, %s139, %s140
    %p144 = pneg %p138
    %p145 = scmp.eq.s32.totalorder %s23, 3
    %p146 = por %p144, %p145
    %p147 = scmp.ne.s32.totalorder %s139, %s142
    %p148 = scmp.eq.s32.totalorder %s23, 0
    %p149 = por %p147, %p148
    %p150 = scmp.ne.s32.totalorder %s139, %s142
    %p151 = scmp.eq.s32.totalorder %s28, 3
    %p152 = por %p150, %p151
    %p153 = scmp.ne.s32.totalorder %s142, %s143
    %p154 = scmp.eq.s32.totalorder %s28, 0
    %p155 = por %p153, %p154
    %p156 = scmp.ne.s32.totalorder %s142, %s143
    %p157 = scmp.eq.s32.totalorder %s29, 3
    %p158 = por %p156, %p157
    %p160 = scmp.ne.s32.totalorder %s143, %s159
    %p161 = scmp.eq.s32.totalorder %s29, 0
    %p162 = por %p160, %p161
    %s163 = ssub.s32 %s31, %s38
    %p164 = scmp.eq.s32.totalorder %s163, 0
    %s166 = sadd.s32 %s165, 1
    %s167 = scalar_select %p164, %s165, %s166
    %p170 = pneg %p164
    %p171 = scmp.eq.s32.totalorder %s23, 3
    %p172 = por %p170, %p171
    %p173 = scmp.ne.s32.totalorder %s165, %s168
    %p174 = scmp.eq.s32.totalorder %s23, 0
    %p175 = por %p173, %p174
    %p176 = scmp.ne.s32.totalorder %s165, %s168
    %p177 = scmp.eq.s32.totalorder %s28, 3
    %p178 = por %p176, %p177
    %p179 = scmp.ne.s32.totalorder %s168, %s169
    %p180 = scmp.eq.s32.totalorder %s28, 0
    %p181 = por %p179, %p180
    %p182 = scmp.ne.s32.totalorder %s168, %s169
    %p183 = scmp.eq.s32.totalorder %s29, 3
    %p184 = por %p182, %p183
    %p186 = scmp.ne.s32.totalorder %s169, %s185
    %p187 = scmp.eq.s32.totalorder %s29, 0
    %p188 = por %p186, %p187
    %s189 = ssub.s32 %s31, %s38
    %p190 = scmp.eq.s32.totalorder %s189, 0
    %s192 = sadd.s32 %s191, 1
    %s193 = scalar_select %p190, %s191, %s192
    %p196 = pneg %p190
    %p197 = scmp.eq.s32.totalorder %s23, 3
    %p198 = por %p196, %p197
    %p199 = scmp.ne.s32.totalorder %s191, %s194
    %p200 = scmp.eq.s32.totalorder %s23, 0
    %p201 = por %p199, %p200
    %p202 = scmp.ne.s32.totalorder %s191, %s194
    %p203 = scmp.eq.s32.totalorder %s28, 3
    %p204 = por %p202, %p203
    %p205 = scmp.ne.s32.totalorder %s194, %s195
    %p206 = scmp.eq.s32.totalorder %s28, 0
    %p207 = por %p205, %p206
    %p208 = scmp.ne.s32.totalorder %s194, %s195
    %p209 = scmp.eq.s32.totalorder %s29, 3
    %p210 = por %p208, %p209
    %p212 = scmp.ne.s32.totalorder %s195, %s211
    %p213 = scmp.eq.s32.totalorder %s29, 0
    %p214 = por %p212, %p213
    %s215 = ssub.s32 %s31, %s38
    %p216 = scmp.eq.s32.totalorder %s215, 0
    %s218 = sadd.s32 %s217, 1
    %s219 = scalar_select %p216, %s217, %s218
    %p222 = pneg %p216
    %p223 = scmp.eq.s32.totalorder %s23, 3
    %p224 = por %p222, %p223
    %p225 = scmp.ne.s32.totalorder %s217, %s220
    %p226 = scmp.eq.s32.totalorder %s23, 0
    %p227 = por %p225, %p226
    %p228 = scmp.ne.s32.totalorder %s217, %s220
    %p229 = scmp.eq.s32.totalorder %s28, 3
    %p230 = por %p228, %p229
    %p231 = scmp.ne.s32.totalorder %s220, %s221
    %p232 = scmp.eq.s32.totalorder %s28, 0
    %p233 = por %p231, %p232
    %p234 = scmp.ne.s32.totalorder %s220, %s221
    %p235 = scmp.eq.s32.totalorder %s29, 3
    %p236 = por %p234, %p235
    %p238 = scmp.ne.s32.totalorder %s221, %s237
    %p239 = scmp.eq.s32.totalorder %s29, 0
    %p240 = por %p238, %p239
    %s241 = ssub.s32 %s31, %s38
    %p242 = scmp.eq.s32.totalorder %s241, 0
    %s244 = sadd.s32 %s243, 1
    %s245 = scalar_select %p242, %s243, %s244
    %p248 = pneg %p242
    %p249 = scmp.eq.s32.totalorder %s23, 3
    %p250 = por %p248, %p249
    %p251 = scmp.ne.s32.totalorder %s243, %s246
    %p252 = scmp.eq.s32.totalorder %s23, 0
    %p253 = por %p251, %p252
    %p254 = scmp.ne.s32.totalorder %s243, %s246
    %p255 = scmp.eq.s32.totalorder %s28, 3
    %p256 = por %p254, %p255
    %p257 = scmp.ne.s32.totalorder %s246, %s247
    %p258 = scmp.eq.s32.totalorder %s28, 0
    %p259 = por %p257, %p258
    %p260 = scmp.ne.s32.totalorder %s246, %s247
    %p261 = scmp.eq.s32.totalorder %s29, 3
    %p262 = por %p260, %p261
    %p264 = scmp.ne.s32.totalorder %s247, %s263
    %p265 = scmp.eq.s32.totalorder %s29, 0
    %p266 = por %p264, %p265
    %s267 = ssub.s32 %s31, %s38
    %p268 = scmp.eq.s32.totalorder %s267, 0
    %s270 = sadd.s32 %s269, 1
    %s271 = scalar_select %p268, %s269, %s270
    %p274 = pneg %p268
    %p275 = scmp.eq.s32.totalorder %s23, 3
    %p276 = por %p274, %p275
    %p277 = scmp.ne.s32.totalorder %s269, %s272
    %p278 = scmp.eq.s32.totalorder %s23, 0
    %p279 = por %p277, %p278
    %p280 = scmp.ne.s32.totalorder %s269, %s272
    %p281 = scmp.eq.s32.totalorder %s28, 3
    %p282 = por %p280, %p281
    %p283 = scmp.ne.s32.totalorder %s272, %s273
    %p284 = scmp.eq.s32.totalorder %s28, 0
    %p285 = por %p283, %p284
    %p286 = scmp.ne.s32.totalorder %s272, %s273
    %p287 = scmp.eq.s32.totalorder %s29, 3
    %p288 = por %p286, %p287
    %p290 = scmp.ne.s32.totalorder %s273, %s289
    %p291 = scmp.eq.s32.totalorder %s29, 0
    %p292 = por %p290, %p291
    %s293 = ssub.s32 %s31, %s38
    %p294 = scmp.eq.s32.totalorder %s293, 0
    %s296 = sadd.s32 %s295, 1
    %s297 = scalar_select %p294, %s295, %s296
    %p300 = pneg %p294
    %p301 = scmp.eq.s32.totalorder %s23, 3
    %p302 = por %p300, %p301
    %p303 = scmp.ne.s32.totalorder %s295, %s298
    %p304 = scmp.eq.s32.totalorder %s23, 0
    %p305 = por %p303, %p304
    %p306 = scmp.ne.s32.totalorder %s295, %s298
    %p307 = scmp.eq.s32.totalorder %s28, 3
    %p308 = por %p306, %p307
    %p309 = scmp.ne.s32.totalorder %s298, %s299
    %p310 = scmp.eq.s32.totalorder %s28, 0
    %p311 = por %p309, %p310
    %p312 = scmp.ne.s32.totalorder %s298, %s299
    %p313 = scmp.eq.s32.totalorder %s29, 3
    %p314 = por %p312, %p313
    %p316 = scmp.ne.s32.totalorder %s299, %s315
    %p317 = scmp.eq.s32.totalorder %s29, 0
    %p318 = por %p316, %p317
    %s319 = ssub.s32 %s31, %s38
    %p320 = scmp.eq.s32.totalorder %s319, 0
    %s322 = sadd.s32 %s321, 1
    %s323 = scalar_select %p320, %s321, %s322
    %p326 = pneg %p320
    %p327 = scmp.eq.s32.totalorder %s23, 3
    %p328 = por %p326, %p327
    %p329 = scmp.ne.s32.totalorder %s321, %s324
    %p330 = scmp.eq.s32.totalorder %s23, 0
    %p331 = por %p329, %p330
    %p332 = scmp.ne.s32.totalorder %s321, %s324
    %p333 = scmp.eq.s32.totalorder %s28, 3
    %p334 = por %p332, %p333
    %p335 = scmp.ne.s32.totalorder %s324, %s325
    %p336 = scmp.eq.s32.totalorder %s28, 0
    %p337 = por %p335, %p336
    %p338 = scmp.ne.s32.totalorder %s324, %s325
    %p339 = scmp.eq.s32.totalorder %s29, 3
    %p340 = por %p338, %p339
    %p342 = scmp.ne.s32.totalorder %s325, %s341
    %p343 = scmp.eq.s32.totalorder %s29, 0
    %p344 = por %p342, %p343
    %s345 = ssub.s32 %s31, %s38
    %p346 = scmp.eq.s32.totalorder %s345, 0
    %s348 = sadd.s32 %s347, 1
    %s349 = scalar_select %p346, %s347, %s348
    %p352 = pneg %p346
    %p353 = scmp.eq.s32.totalorder %s23, 3
    %p354 = por %p352, %p353
    %p355 = scmp.ne.s32.totalorder %s347, %s350
    %p356 = scmp.eq.s32.totalorder %s23, 0
    %p357 = por %p355, %p356
    %p358 = scmp.ne.s32.totalorder %s347, %s350
    %p359 = scmp.eq.s32.totalorder %s28, 3
    %p360 = por %p358, %p359
    %p361 = scmp.ne.s32.totalorder %s350, %s351
    %p362 = scmp.eq.s32.totalorder %s28, 0
    %p363 = por %p361, %p362
    %p364 = scmp.ne.s32.totalorder %s350, %s351
    %p365 = scmp.eq.s32.totalorder %s29, 3
    %p366 = por %p364, %p365
    %p368 = scmp.ne.s32.totalorder %s351, %s367
    %p369 = scmp.eq.s32.totalorder %s29, 0
    %p370 = por %p368, %p369
    %s371 = ssub.s32 %s31, %s38
    %p372 = scmp.eq.s32.totalorder %s371, 0
    %s374 = sadd.s32 %s373, 1
    %s375 = scalar_select %p372, %s373, %s374
    %p378 = pneg %p372
    %p379 = scmp.eq.s32.totalorder %s23, 3
    %p380 = por %p378, %p379
    %p381 = scmp.ne.s32.totalorder %s373, %s376
    %p382 = scmp.eq.s32.totalorder %s23, 0
    %p383 = por %p381, %p382
    %p384 = scmp.ne.s32.totalorder %s373, %s376
    %p385 = scmp.eq.s32.totalorder %s28, 3
    %p386 = por %p384, %p385
    %p387 = scmp.ne.s32.totalorder %s376, %s377
    %p388 = scmp.eq.s32.totalorder %s28, 0
    %p389 = por %p387, %p388
    %p390 = scmp.ne.s32.totalorder %s376, %s377
    %p391 = scmp.eq.s32.totalorder %s29, 3
    %p392 = por %p390, %p391
    %p394 = scmp.ne.s32.totalorder %s377, %s393
    %p395 = scmp.eq.s32.totalorder %s29, 0
    %p396 = por %p394, %p395
    %s397 = ssub.s32 %s31, %s38
    %p398 = scmp.eq.s32.totalorder %s397, 0
    %s400 = sadd.s32 %s399, 1
    %s401 = scalar_select %p398, %s399, %s400
    %p404 = pneg %p398
    %p405 = scmp.eq.s32.totalorder %s23, 3
    %p406 = por %p404, %p405
    %p407 = scmp.ne.s32.totalorder %s399, %s402
    %p408 = scmp.eq.s32.totalorder %s23, 0
    %p409 = por %p407, %p408
    %p410 = scmp.ne.s32.totalorder %s399, %s402
    %p411 = scmp.eq.s32.totalorder %s28, 3
    %p412 = por %p410, %p411
    %p413 = scmp.ne.s32.totalorder %s402, %s403
    %p414 = scmp.eq.s32.totalorder %s28, 0
    %p415 = por %p413, %p414
    %p416 = scmp.ne.s32.totalorder %s402, %s403
    %p417 = scmp.eq.s32.totalorder %s29, 3
    %p418 = por %p416, %p417
    %p420 = scmp.ne.s32.totalorder %s403, %s419
    %p421 = scmp.eq.s32.totalorder %s29, 0
    %p422 = por %p420, %p421
    %s424 = sadd.s32 %s423, 1
    %p427 = scmp.eq.s32.totalorder %s23, 3
    %p428 = scmp.ne.s32.totalorder %s423, %s425
    %p429 = scmp.eq.s32.totalorder %s23, 0
    %p430 = por %p428, %p429
    %p431 = scmp.ne.s32.totalorder %s423, %s425
    %p432 = scmp.eq.s32.totalorder %s28, 3
    %p433 = por %p431, %p432
    %p434 = scmp.ne.s32.totalorder %s425, %s426
    %p435 = scmp.eq.s32.totalorder %s28, 0
    %p436 = por %p434, %p435
    %p437 = scmp.ne.s32.totalorder %s425, %s426
    %p438 = scmp.eq.s32.totalorder %s29, 3
    %p439 = por %p437, %p438
    %p441 = scmp.ne.s32.totalorder %s426, %s440
    %p442 = scmp.eq.s32.totalorder %s29, 0
    %p443 = por %p441, %p442
    %s445 = sadd.s32 %s444, 1
    %p448 = scmp.eq.s32.totalorder %s23, 3
    %p449 = scmp.ne.s32.totalorder %s444, %s446
    %p450 = scmp.eq.s32.totalorder %s23, 0
    %p451 = por %p449, %p450
    %p452 = scmp.ne.s32.totalorder %s444, %s446
    %p453 = scmp.eq.s32.totalorder %s28, 3
    %p454 = por %p452, %p453
    %p455 = scmp.ne.s32.totalorder %s446, %s447
    %p456 = scmp.eq.s32.totalorder %s28, 0
    %p457 = por %p455, %p456
    %p458 = scmp.ne.s32.totalorder %s446, %s447
    %p459 = scmp.eq.s32.totalorder %s29, 3
    %p460 = por %p458, %p459
    %p462 = scmp.ne.s32.totalorder %s447, %s461
    %p463 = scmp.eq.s32.totalorder %s29, 0
    %p464 = por %p462, %p463
    %s465 = ssub.s32 %s30, %s42
    %p466 = scmp.eq.s32.totalorder %s465, 0
    %s468 = sadd.s32 %s467, 1
    %s469 = scalar_select %p466, %s467, %s468
    %p472 = pneg %p466
    %p473 = scmp.eq.s32.totalorder %s23, 3
    %p474 = por %p472, %p473
    %p475 = scmp.ne.s32.totalorder %s467, %s470
    %p476 = scmp.eq.s32.totalorder %s23, 0
    %p477 = por %p475, %p476
    %p478 = scmp.ne.s32.totalorder %s467, %s470
    %p479 = scmp.eq.s32.totalorder %s28, 3
    %p480 = por %p478, %p479
    %p481 = scmp.ne.s32.totalorder %s470, %s471
    %p482 = scmp.eq.s32.totalorder %s28, 0
    %p483 = por %p481, %p482
    %p484 = scmp.ne.s32.totalorder %s470, %s471
    %p485 = scmp.eq.s32.totalorder %s29, 3
    %p486 = por %p484, %p485
    %p488 = scmp.ne.s32.totalorder %s471, %s487
    %p489 = scmp.eq.s32.totalorder %s29, 0
    %p490 = por %p488, %p489
    %p491 = scmp.le.s32.totalorder 1, %s23
    %p492 = scmp.lt.s32.totalorder %s23, 5
    %p493 = pnand %p491, %p492
    %p494 = pneg %p493
    // Predicated region
    $region9: #{bert_model_encoder_forward.1} parent=5 // pred_check
      _
    $region10: #{bert_model_encoder_forward.1} parent=5 // pred_check_branch
      %496 = sbr.rel (%p493) target = $region12
    $region11: #{bert_model_encoder_forward.1} parent=5 // pred_region
      %s497 = ssub.s32 %s23, 1
      // Predicated region
      $region13: #{bert_model_encoder_forward.1} parent=11 // pred_check
        %p498 = pneg %p82
      $region14: #{bert_model_encoder_forward.1} parent=11 // pred_check_branch
        %500 = sbr.rel (%p498) target = $region16
      $region15: #{bert_model_encoder_forward.1} parent=11 // pred_region
        _
      $region16: #{bert_model_encoder_forward.1} parent=11 // pred_fallthru
        _
      // Predicated region
      $region17: #{bert_model_encoder_forward.1} parent=11 // pred_check
        %p501 = pneg %p103
      $region18: #{bert_model_encoder_forward.1} parent=11 // pred_check_branch
        %503 = sbr.rel (%p501) target = $region20
      $region19: #{bert_model_encoder_forward.1} parent=11 // pred_region
        _
      $region20: #{bert_model_encoder_forward.1} parent=11 // pred_fallthru
        _
      // Predicated region
      $region21: #{bert_model_encoder_forward.1} parent=11 // pred_check
        %p504 = pneg %p436
      $region22: #{bert_model_encoder_forward.1} parent=11 // pred_check_branch
        %506 = sbr.rel (%p504) target = $region24
      $region23: #{bert_model_encoder_forward.1} parent=11 // pred_region
        _
      $region24: #{bert_model_encoder_forward.1} parent=11 // pred_fallthru
        _
      // Predicated region
      $region25: #{bert_model_encoder_forward.1} parent=11 // pred_check
        %p507 = pneg %p457
      $region26: #{bert_model_encoder_forward.1} parent=11 // pred_check_branch
        %509 = sbr.rel (%p507) target = $region28
      $region27: #{bert_model_encoder_forward.1} parent=11 // pred_region
        _
      $region28: #{bert_model_encoder_forward.1} parent=11 // pred_fallthru
        _
    $region12: #{bert_model_encoder_forward.1} parent=5 // pred_fallthru
      _
    %p510 = scmp.lt.s32.totalorder %s23, 4
    // Predicated region
    $region29: #{bert_model_encoder_forward.1} parent=5 // pred_check
      %p511 = pneg %p510
    $region30: #{bert_model_encoder_forward.1} parent=5 // pred_check_branch
      %513 = sbr.rel (%p511) target = $region32
    $region31: #{bert_model_encoder_forward.1} parent=5 // pred_region
      // Predicated region
      $region33: #{bert_model_encoder_forward.1} parent=31 // pred_check
        %p514 = pneg %p55
      $region34: #{bert_model_encoder_forward.1} parent=31 // pred_check_branch
        %516 = sbr.rel (%p514) target = $region36
      $region35: #{bert_model_encoder_forward.1} parent=31 // pred_region
        %p517 = scmp.lt.s32.totalorder %s30, 1
        %s518 = scalar_select %p517, %s30, 1
        %s519 = smul.addr %s518, 8
        %s520 = scalar_lea.vmem %s0, %s519
      $region36: #{bert_model_encoder_forward.1} parent=31 // pred_fallthru
        _
      // Predicated region
      $region37: #{bert_model_encoder_forward.1} parent=31 // pred_check
        %p521 = pneg %p123
      $region38: #{bert_model_encoder_forward.1} parent=31 // pred_check_branch
        %523 = sbr.rel (%p521) target = $region40
      $region39: #{bert_model_encoder_forward.1} parent=31 // pred_region
        %p524 = scmp.lt.s32.totalorder %s31, 1
        %s525 = scalar_select %p524, %s31, 1
        %s526 = smul.addr %s525, 4
        %s527 = smul.addr %s526, 4
        %s528 = scalar_lea.vmem %s3, %s527
      $region40: #{bert_model_encoder_forward.1} parent=31 // pred_fallthru
        _
      // Predicated region
      $region41: #{bert_model_encoder_forward.1} parent=31 // pred_check
        %p529 = pneg %p149
      $region42: #{bert_model_encoder_forward.1} parent=31 // pred_check_branch
        %531 = sbr.rel (%p529) target = $region44
      $region43: #{bert_model_encoder_forward.1} parent=31 // pred_region
        %p532 = scmp.lt.s32.totalorder %s31, 1
        %s533 = scalar_select %p532, %s31, 1
        %s534 = scalar_lea.vmem %s4, %s533
      $region44: #{bert_model_encoder_forward.1} parent=31 // pred_fallthru
        _
      // Predicated region
      $region45: #{bert_model_encoder_forward.1} parent=31 // pred_check
        %p535 = pneg %p175
      $region46: #{bert_model_encoder_forward.1} parent=31 // pred_check_branch
        %537 = sbr.rel (%p535) target = $region48
      $region47: #{bert_model_encoder_forward.1} parent=31 // pred_region
        %p538 = scmp.lt.s32.totalorder %s31, 1
        %s539 = scalar_select %p538, %s31, 1
        %s540 = smul.addr %s539, 4
        %s541 = smul.addr %s540, 4
        %s542 = scalar_lea.vmem %s5, %s541
      $region48: #{bert_model_encoder_forward.1} parent=31 // pred_fallthru
        _
      // Predicated region
      $region49: #{bert_model_encoder_forward.1} parent=31 // pred_check
        %p543 = pneg %p201
      $region50: #{bert_model_encoder_forward.1} parent=31 // pred_check_branch
        %545 = sbr.rel (%p543) target = $region52
      $region51: #{bert_model_encoder_forward.1} parent=31 // pred_region
        %p546 = scmp.lt.s32.totalorder %s31, 1
        %s547 = scalar_select %p546, %s31, 1
        %s548 = scalar_lea.vmem %s6, %s547
      $region52: #{bert_model_encoder_forward.1} parent=31 // pred_fallthru
        _
      // Predicated region
      $region53: #{bert_model_encoder_forward.1} parent=31 // pred_check
        %p549 = pneg %p227
      $region54: #{bert_model_encoder_forward.1} parent=31 // pred_check_branch
        %551 = sbr.rel (%p549) target = $region56
      $region55: #{bert_model_encoder_forward.1} parent=31 // pred_region
        %p552 = scmp.lt.s32.totalorder %s31, 1
        %s553 = scalar_select %p552, %s31, 1
        %s554 = scalar_lea.vmem %s7, %s553
      $region56: #{bert_model_encoder_forward.1} parent=31 // pred_fallthru
        _
      // Predicated region
      $region57: #{bert_model_encoder_forward.1} parent=31 // pred_check
        %p555 = pneg %p253
      $region58: #{bert_model_encoder_forward.1} parent=31 // pred_check_branch
        %557 = sbr.rel (%p555) target = $region60
      $region59: #{bert_model_encoder_forward.1} parent=31 // pred_region
        %p558 = scmp.lt.s32.totalorder %s31, 1
        %s559 = scalar_select %p558, %s31, 1
        %s560 = scalar_lea.vmem %s8, %s559
      $region60: #{bert_model_encoder_forward.1} parent=31 // pred_fallthru
        _
      // Predicated region
      $region61: #{bert_model_encoder_forward.1} parent=31 // pred_check
        %p561 = pneg %p279
      $region62: #{bert_model_encoder_forward.1} parent=31 // pred_check_branch
        %563 = sbr.rel (%p561) target = $region64
      $region63: #{bert_model_encoder_forward.1} parent=31 // pred_region
        %p564 = scmp.lt.s32.totalorder %s31, 1
        %s565 = scalar_select %p564, %s31, 1
        %s566 = smul.addr %s565, 4
        %s567 = smul.addr %s566, 4
        %s568 = scalar_lea.vmem %s9, %s567
      $region64: #{bert_model_encoder_forward.1} parent=31 // pred_fallthru
        _
      // Predicated region
      $region65: #{bert_model_encoder_forward.1} parent=31 // pred_check
        %p569 = pneg %p305
      $region66: #{bert_model_encoder_forward.1} parent=31 // pred_check_branch
        %571 = sbr.rel (%p569) target = $region68
      $region67: #{bert_model_encoder_forward.1} parent=31 // pred_region
        %p572 = scmp.lt.s32.totalorder %s31, 1
        %s573 = scalar_select %p572, %s31, 1
        %s574 = scalar_lea.vmem %s10, %s573
      $region68: #{bert_model_encoder_forward.1} parent=31 // pred_fallthru
        _
      // Predicated region
      $region69: #{bert_model_encoder_forward.1} parent=31 // pred_check
        %p575 = pneg %p331
      $region70: #{bert_model_encoder_forward.1} parent=31 // pred_check_branch
        %577 = sbr.rel (%p575) target = $region72
      $region71: #{bert_model_encoder_forward.1} parent=31 // pred_region
        %p578 = scmp.lt.s32.totalorder %s31, 1
        %s579 = scalar_select %p578, %s31, 1
        %s580 = smul.addr %s579, 8
        %s581 = smul.addr %s580, 4
        %s582 = scalar_lea.vmem %s11, %s581
      $region72: #{bert_model_encoder_forward.1} parent=31 // pred_fallthru
        _
      // Predicated region
      $region73: #{bert_model_encoder_forward.1} parent=31 // pred_check
        %p583 = pneg %p357
      $region74: #{bert_model_encoder_forward.1} parent=31 // pred_check_branch
        %585 = sbr.rel (%p583) target = $region76
      $region75: #{bert_model_encoder_forward.1} parent=31 // pred_region
        %p586 = scmp.lt.s32.totalorder %s31, 1
        %s587 = scalar_select %p586, %s31, 1
        %s588 = scalar_lea.vmem %s12, %s587
      $region76: #{bert_model_encoder_forward.1} parent=31 // pred_fallthru
        _
      // Predicated region
      $region77: #{bert_model_encoder_forward.1} parent=31 // pred_check
        %p589 = pneg %p383
      $region78: #{bert_model_encoder_forward.1} parent=31 // pred_check_branch
        %591 = sbr.rel (%p589) target = $region80
      $region79: #{bert_model_encoder_forward.1} parent=31 // pred_region
        %p592 = scmp.lt.s32.totalorder %s31, 1
        %s593 = scalar_select %p592, %s31, 1
        %s594 = scalar_lea.vmem %s13, %s593
      $region80: #{bert_model_encoder_forward.1} parent=31 // pred_fallthru
        _
      // Predicated region
      $region81: #{bert_model_encoder_forward.1} parent=31 // pred_check
        %p595 = pneg %p409
      $region82: #{bert_model_encoder_forward.1} parent=31 // pred_check_branch
        %597 = sbr.rel (%p595) target = $region84
      $region83: #{bert_model_encoder_forward.1} parent=31 // pred_region
        %p598 = scmp.lt.s32.totalorder %s31, 1
        %s599 = scalar_select %p598, %s31, 1
        %s600 = scalar_lea.vmem %s14, %s599
      $region84: #{bert_model_encoder_forward.1} parent=31 // pred_fallthru
        _
    $region32: #{bert_model_encoder_forward.1} parent=5 // pred_fallthru
      _
    %p601 = scmp.le.s32.totalorder 1, %s23
    %p602 = scmp.lt.s32.totalorder %s23, 5
    %p603 = pnand %p601, %p602
    %p604 = pneg %p603
    // Predicated region
    $region85: #{bert_model_encoder_forward.1} parent=5 // pred_check
      _
    $region86: #{bert_model_encoder_forward.1} parent=5 // pred_check_branch
      %606 = sbr.rel (%p603) target = $region88
    $region87: #{bert_model_encoder_forward.1} parent=5 // pred_region
      %s607 = ssub.s32 %s23, 1
      %p608 = scmp.lt.s32.totalorder %s32, 1
      %s609 = scalar_select %p608, %s32, 1
      %s610 = smul.addr %s609, 8
      %s611 = scalar_lea.vmem %s0, %s610
      %p612 = pneg %p61
      %p613 = pneg %p58
      %p614 = pneg %p82
      %p615 = pneg %p79
      %p616 = pneg %p103
      %p617 = pneg %p100
      %p618 = scmp.lt.s32.totalorder %s33, 1
      %s619 = scalar_select %p618, %s33, 1
      %s620 = smul.addr %s619, 4
      %s621 = smul.addr %s620, 4
      %s622 = scalar_lea.vmem %s3, %s621
      %p623 = pneg %p129
      %p624 = pneg %p126
      %p625 = scmp.lt.s32.totalorder %s33, 1
      %s626 = scalar_select %p625, %s33, 1
      %s627 = scalar_lea.vmem %s4, %s626
      %p628 = pneg %p155
      %p629 = pneg %p152
      %p630 = scmp.lt.s32.totalorder %s33, 1
      %s631 = scalar_select %p630, %s33, 1
      %s632 = smul.addr %s631, 4
      %s633 = smul.addr %s632, 4
      %s634 = scalar_lea.vmem %s5, %s633
      %p635 = pneg %p181
      %p636 = pneg %p178
      %p637 = scmp.lt.s32.totalorder %s33, 1
      %s638 = scalar_select %p637, %s33, 1
      %s639 = scalar_lea.vmem %s6, %s638
      %p640 = pneg %p207
      %p641 = pneg %p204
      %p642 = scmp.lt.s32.totalorder %s33, 1
      %s643 = scalar_select %p642, %s33, 1
      %s644 = scalar_lea.vmem %s7, %s643
      %p645 = pneg %p233
      %p646 = pneg %p230
      %p647 = scmp.lt.s32.totalorder %s33, 1
      %s648 = scalar_select %p647, %s33, 1
      %s649 = scalar_lea.vmem %s8, %s648
      %p650 = pneg %p259
      %p651 = pneg %p256
      %p652 = scmp.lt.s32.totalorder %s33, 1
      %s653 = scalar_select %p652, %s33, 1
      %s654 = smul.addr %s653, 4
      %s655 = smul.addr %s654, 4
      %s656 = scalar_lea.vmem %s9, %s655
      %p657 = pneg %p285
      %p658 = pneg %p282
      %p659 = scmp.lt.s32.totalorder %s33, 1
      %s660 = scalar_select %p659, %s33, 1
      %s661 = scalar_lea.vmem %s10, %s660
      %p662 = pneg %p311
      %p663 = pneg %p308
      %p664 = scmp.lt.s32.totalorder %s33, 1
      %s665 = scalar_select %p664, %s33, 1
      %s666 = smul.addr %s665, 8
      %s667 = smul.addr %s666, 4
      %s668 = scalar_lea.vmem %s11, %s667
      %p669 = pneg %p337
      %p670 = pneg %p334
      %p671 = scmp.lt.s32.totalorder %s33, 1
      %s672 = scalar_select %p671, %s33, 1
      %s673 = scalar_lea.vmem %s12, %s672
      %p674 = pneg %p363
      %p675 = pneg %p360
      %p676 = scmp.lt.s32.totalorder %s33, 1
      %s677 = scalar_select %p676, %s33, 1
      %s678 = scalar_lea.vmem %s13, %s677
      %p679 = pneg %p389
      %p680 = pneg %p386
      %p681 = scmp.lt.s32.totalorder %s33, 1
      %s682 = scalar_select %p681, %s33, 1
      %s683 = scalar_lea.vmem %s14, %s682
      %p684 = pneg %p415
      %p685 = pneg %p412
      %p686 = pneg %p436
      %p687 = pneg %p433
      %p688 = pneg %p457
      %p689 = pneg %p454
      %p690 = pneg %p483
      %p691 = pneg %p480
      %p692 = scmp.lt.s32.totalorder %s32, 1
      %s693 = scalar_select %p692, %s32, 1
      %s694 = smul.addr %s693, 8
      %s695 = scalar_lea.vmem %s17, %s694
      %p696 = scmp.lt.s32.totalorder %s32, 1
      %s697 = scalar_select %p696, %s32, 1
      %s698 = smul.addr %s697, 8
      %s699 = scalar_lea.vmem %s0, %s698
      %p700 = scmp.lt.s32.totalorder %s33, 1
      %s701 = scalar_select %p700, %s33, 1
      %s702 = smul.addr %s701, 4
      %s703 = smul.addr %s702, 4
      %s704 = scalar_lea.vmem %s3, %s703
      %p705 = scmp.lt.s32.totalorder %s33, 1
      %s706 = scalar_select %p705, %s33, 1
      %s707 = scalar_lea.vmem %s4, %s706
      %p708 = scmp.lt.s32.totalorder %s33, 1
      %s709 = scalar_select %p708, %s33, 1
      %s710 = smul.addr %s709, 4
      %s711 = smul.addr %s710, 4
      %s712 = scalar_lea.vmem %s5, %s711
      %p713 = scmp.lt.s32.totalorder %s33, 1
      %s714 = scalar_select %p713, %s33, 1
      %s715 = scalar_lea.vmem %s6, %s714
      %p716 = scmp.lt.s32.totalorder %s33, 1
      %s717 = scalar_select %p716, %s33, 1
      %s718 = scalar_lea.vmem %s7, %s717
      %p719 = scmp.lt.s32.totalorder %s33, 1
      %s720 = scalar_select %p719, %s33, 1
      %s721 = scalar_lea.vmem %s8, %s720
      %p722 = scmp.lt.s32.totalorder %s33, 1
      %s723 = scalar_select %p722, %s33, 1
      %s724 = smul.addr %s723, 4
      %s725 = smul.addr %s724, 4
      %s726 = scalar_lea.vmem %s9, %s725
      %p727 = scmp.lt.s32.totalorder %s33, 1
      %s728 = scalar_select %p727, %s33, 1
      %s729 = scalar_lea.vmem %s10, %s728
      %p730 = scmp.lt.s32.totalorder %s33, 1
      %s731 = scalar_select %p730, %s33, 1
      %s732 = smul.addr %s731, 8
      %s733 = smul.addr %s732, 4
      %s734 = scalar_lea.vmem %s11, %s733
      %p735 = scmp.lt.s32.totalorder %s33, 1
      %s736 = scalar_select %p735, %s33, 1
      %s737 = scalar_lea.vmem %s12, %s736
      %p738 = scmp.lt.s32.totalorder %s33, 1
      %s739 = scalar_select %p738, %s33, 1
      %s740 = scalar_lea.vmem %s13, %s739
      %p741 = scmp.lt.s32.totalorder %s33, 1
      %s742 = scalar_select %p741, %s33, 1
      %s743 = scalar_lea.vmem %s14, %s742
      %p744 = scmp.lt.s32.totalorder %s32, 1
      %s745 = scalar_select %p744, %s32, 1
      %s746 = smul.addr %s745, 8
      %s747 = scalar_lea.vmem %s17, %s746
      %p749 = scmp.eq.s32.totalorder %s33, 0
      // Predicated region
      $region89: #{bert_model_encoder_forward.1} parent=87 // pred_check
        %p750 = pneg %p749
      $region90: #{bert_model_encoder_forward.1} parent=87 // pred_check_branch
        %752 = sbr.rel (%p750) target = $region92
      $region91: #{bert_model_encoder_forward.1} parent=87 // pred_region
        %v753 = vld [vmem:[%s699] sm:$0xff]
        %v754 = vld [vmem:[%s1] sm:$0x1]
        %v755 = vld [vmem:[%s2] sm:$0x1]
        %vm756 = vcmask 261120
        %v757 = vsel %vm756, %v753, 0.0
        %758 = vadd.xlane.f32.xlu0 %v757
        %v759 = vpop.xlane.xlu0 %758
        %v760 = vrcp.pop 32.0
        %v761 = vmul.f32 %v759, %v760
        %v762 = vsub.f32 %v753, %v761
        %v763 = vmul.f32 %v762, %v762
        %v764 = vsel %vm756, %v763, 0.0
        %765 = vadd.xlane.f32.xlu0 %v764
        %v766 = vpop.xlane.xlu0 %765
        %v767 = vmul.f32 %v766, %v760
        %v768 = vadd.f32 %v767, 1e-12
        %v769 = vrsqrt.pop %v768
        %v770 = vmul.f32 %v762, %v769
        %v772 = vlaneseq
        %v773 = vshrl.u32 %v772, 7
        %v774 = vsub.s32 0, %v773
        %v775 = vrot.slane %v754, %v774
        %v777 = vmul.f32 %v770, %v775
        %v779 = vlaneseq
        %v780 = vshrl.u32 %v779, 7
        %v781 = vsub.s32 0, %v780
        %v782 = vrot.slane %v755, %v781
        %v784 = vadd.f32 %v777, %v782
        %785 = vst.msk [vmem:[#allocation2] sm:$0xff] %vm756, %v784
      $region92: #{bert_model_encoder_forward.1} parent=87 // pred_fallthru
        _
      %v786 = vld [vmem:[#allocation2] sm:$0xff]
      %v787 = vpack.c.bf16 %v786, %v786
      %v788 = vld [vmem:[%s704] sm:$0xf]
      %v789 = vld [vmem:[%s704 + $0x4] sm:$0xf]
      %v790 = vld [vmem:[%s704 + $0x8] sm:$0xf]
      %v791 = vld [vmem:[%s704 + $0xc] sm:$0xf]
      %v792 = vld [vmem:[%s707] sm:$0x1]
      %v794 = vlaneseq
      %v795 = vshrl.u32 %v794, 7
      %v796 = vsub.s32 0, %v795
      %v797 = vrot.slane %v792, %v796
      %v803 = vunpack.c.l.b16 %v788
      %v804 = vunpack.c.l.b16 %v789
      %v805 = vunpack.c.l.b16 %v790
      %v806 = vunpack.c.l.b16 %v791
      %v807 = vpack.c.b16 %v804, %v803
      %v808 = vpack.c.b16 %v806, %v805
      %vm811 = vcmask 261120
      %v813 = vsel %vm811, %v787, 0
      %815 = vmatprep.subr.bf16.mxu0 0
      %816 = vmatpush1.bf16.msra.mxu0 %v807
      %817 = vmatprep.subr.bf16.mxu0 0
      %818 = vmatpush1.bf16.msra.mxu0 %v808
      %819 = vmatprep.subr.bf16.mxu0 0
      %820 = vmatpush1.bf16.msra.mxu0 0
      %821 = vmatprep.subr.bf16.mxu0 0
      %822 = vmatpush1.bf16.msra.mxu0 0
      %823 = vmatprep.subr.bf16.mxu0 0
      %824 = vmatpush1.bf16.msra.mxu0 0
      %825 = vmatprep.subr.bf16.mxu0 0
      %826 = vmatpush1.bf16.msra.mxu0 0
      %827 = vmatprep.subr.bf16.mxu0 0
      %828 = vmatpush1.bf16.msra.mxu0 0
      %829 = vmatprep.subr.bf16.mxu0 0
      %830 = vmatpush1.bf16.msra.mxu0 0
      %831 = vmatprep.subr.bf16.mxu0 0
      %832 = vmatpush1.bf16.msra.mxu0 0
      %833 = vmatprep.subr.bf16.mxu0 0
      %834 = vmatpush1.bf16.msra.mxu0 0
      %835 = vmatprep.subr.bf16.mxu0 0
      %836 = vmatpush1.bf16.msra.mxu0 0
      %837 = vmatprep.subr.bf16.mxu0 0
      %838 = vmatpush1.bf16.msra.mxu0 0
      %839 = vmatprep.subr.bf16.mxu0 0
      %840 = vmatpush1.bf16.msra.mxu0 0
      %841 = vmatprep.subr.bf16.mxu0 0
      %842 = vmatpush1.bf16.msra.mxu0 0
      %843 = vmatprep.subr.bf16.mxu0 0
      %844 = vmatpush1.bf16.msra.mxu0 0
      %845 = vmatprep.subr.bf16.mxu0 0
      %846 = vmatpush1.bf16.msra.mxu0 0
      %847 = vmatprep.mubr.bf16.mxu0 0
      %848 = vmatmul.mubr.bf16.gmra.mrb[0].mxu0 %v813
      %v849 = vpop.f32.mrb[0].mxu0
      %v850 = vadd.f32 %v797, %v849
      %v851 = vpop.f32.mrb[0].mxu0
      %v852 = vpop.f32.mrb[0].mxu0
      %v853 = vpop.f32.mrb[0].mxu0
      %854 = vdwg.mxu0
      %v855 = vmul.f32 %v850, 0.25
      %v856 = vpack.c.bf16 %v855, %v855
      %v857 = vpack.c.bf16 %v850, %v850
      %859 = vrot.lane.b32.xlu0 %v857, 96
      %v860 = vpop.permute.xlu0 %859
      %vm861 = vcmask 130048
      %v863 = vsel %vm861, %v856, 0
      %v866 = vsel %vm861, %v860, 0
      %868 = vmatprep.subr.bf16.mxu0 0
      %869 = vmatpush1.bf16.xpose.msra.mxu0 %v866
      %870 = vmatprep.subr.bf16.mxu0 0
      %871 = vmatpush1.bf16.xpose.msra.mxu0 0
      %872 = vmatprep.subr.bf16.mxu0 0
      %873 = vmatpush1.bf16.xpose.msra.mxu0 0
      %874 = vmatprep.subr.bf16.mxu0 0
      %875 = vmatpush1.bf16.xpose.msra.mxu0 0
      %876 = vmatprep.subr.bf16.mxu0 0
      %877 = vmatpush1.bf16.xpose.msra.mxu0 0
      %878 = vmatprep.subr.bf16.mxu0 0
      %879 = vmatpush1.bf16.xpose.msra.mxu0 0
      %880 = vmatprep.subr.bf16.mxu0 0
      %881 = vmatpush1.bf16.xpose.msra.mxu0 0
      %882 = vmatprep.subr.bf16.mxu0 0
      %883 = vmatpush1.bf16.xpose.msra.mxu0 0
      %884 = vmatprep.subr.bf16.mxu0 0
      %885 = vmatpush1.bf16.xpose.msra.mxu0 0
      %886 = vmatprep.subr.bf16.mxu0 0
      %887 = vmatpush1.bf16.xpose.msra.mxu0 0
      %888 = vmatprep.subr.bf16.mxu0 0
      %889 = vmatpush1.bf16.xpose.msra.mxu0 0
      %890 = vmatprep.subr.bf16.mxu0 0
      %891 = vmatpush1.bf16.xpose.msra.mxu0 0
      %892 = vmatprep.subr.bf16.mxu0 0
      %893 = vmatpush1.bf16.xpose.msra.mxu0 0
      %894 = vmatprep.subr.bf16.mxu0 0
      %895 = vmatpush1.bf16.xpose.msra.mxu0 0
      %896 = vmatprep.subr.bf16.mxu0 0
      %897 = vmatpush1.bf16.xpose.msra.mxu0 0
      %898 = vmatprep.subr.bf16.mxu0 0
      %899 = vmatpush1.bf16.xpose.msra.mxu0 0
      %900 = vmatprep.mubr.bf16.mxu0 0
      %901 = vmatmul.mubr.bf16.gmra.mrb[0].mxu0 %v863
      %v902 = vpop.f32.mrb[0].mxu0
      %v903 = vadd.f32 0.0, %v902
      %v904 = vpop.f32.mrb[0].mxu0
      %v905 = vpop.f32.mrb[0].mxu0
      %v906 = vpop.f32.mrb[0].mxu0
      %907 = vdwg.mxu0
      %vm908 = vcmask 64512
      %v909 = vsel %vm908, %v903, -inf
      %910 = vmax.xlane.f32.xlu0 %v909
      %v911 = vpop.xlane.xlu0 %910
      %v912 = vsub.f32 %v903, %v911
      %v913 = vmul.f32 %v912, 1.442695
      %v914 = vpow.pop %v913
      %v915 = vsel %vm908, %v914, 0.0
      %916 = vadd.xlane.f32.xlu0 %v915
      %v917 = vpop.xlane.xlu0 %916
      %v918 = vrcp.pop %v917
      %v919 = vmul.f32 %v914, %v918
      %v920 = vpack.c.bf16 %v919, %v919
      %921 = vrot.lane.b32.xlu0 %v857, 64
      %v922 = vpop.permute.xlu0 %921
      %v924 = vsel %vm908, %v920, 0
      %vm926 = vcmask 1043456
      %v928 = vsel %vm926, %v922, 0
      %930 = vmatprep.subr.bf16.mxu0 0
      %931 = vmatpush1.bf16.msra.mxu0 %v928
      %932 = vmatprep.subr.bf16.mxu0 0
      %933 = vmatpush1.bf16.msra.mxu0 0
      %934 = vmatprep.subr.bf16.mxu0 0
      %935 = vmatpush1.bf16.msra.mxu0 0
      %936 = vmatprep.subr.bf16.mxu0 0
      %937 = vmatpush1.bf16.msra.mxu0 0
      %938 = vmatprep.subr.bf16.mxu0 0
      %939 = vmatpush1.bf16.msra.mxu0 0
      %940 = vmatprep.subr.bf16.mxu0 0
      %941 = vmatpush1.bf16.msra.mxu0 0
      %942 = vmatprep.subr.bf16.mxu0 0
      %943 = vmatpush1.bf16.msra.mxu0 0
      %944 = vmatprep.subr.bf16.mxu0 0
      %945 = vmatpush1.bf16.msra.mxu0 0
      %946 = vmatprep.subr.bf16.mxu0 0
      %947 = vmatpush1.bf16.msra.mxu0 0
      %948 = vmatprep.subr.bf16.mxu0 0
      %949 = vmatpush1.bf16.msra.mxu0 0
      %950 = vmatprep.subr.bf16.mxu0 0
      %951 = vmatpush1.bf16.msra.mxu0 0
      %952 = vmatprep.subr.bf16.mxu0 0
      %953 = vmatpush1.bf16.msra.mxu0 0
      %954 = vmatprep.subr.bf16.mxu0 0
      %955 = vmatpush1.bf16.msra.mxu0 0
      %956 = vmatprep.subr.bf16.mxu0 0
      %957 = vmatpush1.bf16.msra.mxu0 0
      %958 = vmatprep.subr.bf16.mxu0 0
      %959 = vmatpush1.bf16.msra.mxu0 0
      %960 = vmatprep.subr.bf16.mxu0 0
      %961 = vmatpush1.bf16.msra.mxu0 0
      %962 = vmatprep.mubr.bf16.mxu0 0
      %963 = vmatmul.mubr.bf16.gmra.mrb[0].mxu0 %v924
      %v964 = vpop.f32.mrb[0].mxu0
      %v965 = vadd.f32 0.0, %v964
      %v966 = vpop.f32.mrb[0].mxu0
      %v967 = vpop.f32.mrb[0].mxu0
      %v968 = vpop.f32.mrb[0].mxu0
      %969 = vdwg.mxu0
      %971 = vrot.lane.b32.xlu0 %v856, 112
      %v972 = vpop.permute.xlu0 %971
      %973 = vrot.lane.b32.xlu0 %v857, 80
      %v974 = vpop.permute.xlu0 %973
      %v976 = vsel %vm861, %v972, 0
      %v979 = vsel %vm861, %v974, 0
      %981 = vmatprep.subr.bf16.mxu0 0
      %982 = vmatpush1.bf16.xpose.msra.mxu0 %v979
      %983 = vmatprep.subr.bf16.mxu0 0
      %984 = vmatpush1.bf16.xpose.msra.mxu0 0
      %985 = vmatprep.subr.bf16.mxu0 0
      %986 = vmatpush1.bf16.xpose.msra.mxu0 0
      %987 = vmatprep.subr.bf16.mxu0 0
      %988 = vmatpush1.bf16.xpose.msra.mxu0 0
      %989 = vmatprep.subr.bf16.mxu0 0
      %990 = vmatpush1.bf16.xpose.msra.mxu0 0
      %991 = vmatprep.subr.bf16.mxu0 0
      %992 = vmatpush1.bf16.xpose.msra.mxu0 0
      %993 = vmatprep.subr.bf16.mxu0 0
      %994 = vmatpush1.bf16.xpose.msra.mxu0 0
      %995 = vmatprep.subr.bf16.mxu0 0
      %996 = vmatpush1.bf16.xpose.msra.mxu0 0
      %997 = vmatprep.subr.bf16.mxu0 0
      %998 = vmatpush1.bf16.xpose.msra.mxu0 0
      %999 = vmatprep.subr.bf16.mxu0 0
      %1000 = vmatpush1.bf16.xpose.msra.mxu0 0
      %1001 = vmatprep.subr.bf16.mxu0 0
      %1002 = vmatpush1.bf16.xpose.msra.mxu0 0
      %1003 = vmatprep.subr.bf16.mxu0 0
      %1004 = vmatpush1.bf16.xpose.msra.mxu0 0
      %1005 = vmatprep.subr.bf16.mxu0 0
      %1006 = vmatpush1.bf16.xpose.msra.mxu0 0
      %1007 = vmatprep.subr.bf16.mxu0 0
      %1008 = vmatpush1.bf16.xpose.msra.mxu0 0
      %1009 = vmatprep.subr.bf16.mxu0 0
      %1010 = vmatpush1.bf16.xpose.msra.mxu0 0
      %1011 = vmatprep.subr.bf16.mxu0 0
      %1012 = vmatpush1.bf16.xpose.msra.mxu0 0
      %1013 = vmatprep.mubr.bf16.mxu0 0
      %1014 = vmatmul.mubr.bf16.gmra.mrb[0].mxu0 %v976
      %v1015 = vpop.f32.mrb[0].mxu0
      %v1016 = vadd.f32 0.0, %v1015
      %v1017 = vpop.f32.mrb[0].mxu0
      %v1018 = vpop.f32.mrb[0].mxu0
      %v1019 = vpop.f32.mrb[0].mxu0
      %1020 = vdwg.mxu0
      %v1021 = vsel %vm908, %v1016, -inf
      %1022 = vmax.xlane.f32.xlu0 %v1021
      %v1023 = vpop.xlane.xlu0 %1022
      %v1024 = vsub.f32 %v1016, %v1023
      %v1025 = vmul.f32 %v1024, 1.442695
      %v1026 = vpow.pop %v1025
      %v1027 = vsel %vm908, %v1026, 0.0
      %1028 = vadd.xlane.f32.xlu0 %v1027
      %v1029 = vpop.xlane.xlu0 %1028
      %v1030 = vrcp.pop %v1029
      %v1031 = vmul.f32 %v1026, %v1030
      %v1032 = vpack.c.bf16 %v1031, %v1031
      %1033 = vrot.lane.b32.xlu0 %v857, 48
      %v1034 = vpop.permute.xlu0 %1033
      %v1036 = vsel %vm908, %v1032, 0
      %v1039 = vsel %vm926, %v1034, 0
      %1041 = vmatprep.subr.bf16.mxu0 0
      %1042 = vmatpush1.bf16.msra.mxu0 %v1039
      %1043 = vmatprep.subr.bf16.mxu0 0
      %1044 = vmatpush1.bf16.msra.mxu0 0
      %1045 = vmatprep.subr.bf16.mxu0 0
      %1046 = vmatpush1.bf16.msra.mxu0 0
      %1047 = vmatprep.subr.bf16.mxu0 0
      %1048 = vmatpush1.bf16.msra.mxu0 0
      %1049 = vmatprep.subr.bf16.mxu0 0
      %1050 = vmatpush1.bf16.msra.mxu0 0
      %1051 = vmatprep.subr.bf16.mxu0 0
      %1052 = vmatpush1.bf16.msra.mxu0 0
      %1053 = vmatprep.subr.bf16.mxu0 0
      %1054 = vmatpush1.bf16.msra.mxu0 0
      %1055 = vmatprep.subr.bf16.mxu0 0
      %1056 = vmatpush1.bf16.msra.mxu0 0
      %1057 = vmatprep.subr.bf16.mxu0 0
      %1058 = vmatpush1.bf16.msra.mxu0 0
      %1059 = vmatprep.subr.bf16.mxu0 0
      %1060 = vmatpush1.bf16.msra.mxu0 0
      %1061 = vmatprep.subr.bf16.mxu0 0
      %1062 = vmatpush1.bf16.msra.mxu0 0
      %1063 = vmatprep.subr.bf16.mxu0 0
      %1064 = vmatpush1.bf16.msra.mxu0 0
      %1065 = vmatprep.subr.bf16.mxu0 0
      %1066 = vmatpush1.bf16.msra.mxu0 0
      %1067 = vmatprep.subr.bf16.mxu0 0
      %1068 = vmatpush1.bf16.msra.mxu0 0
      %1069 = vmatprep.subr.bf16.mxu0 0
      %1070 = vmatpush1.bf16.msra.mxu0 0
      %1071 = vmatprep.subr.bf16.mxu0 0
      %1072 = vmatpush1.bf16.msra.mxu0 0
      %1073 = vmatprep.mubr.bf16.mxu0 0
      %1074 = vmatmul.mubr.bf16.gmra.mrb[0].mxu0 %v1036
      %v1075 = vpop.f32.mrb[0].mxu0
      %v1076 = vadd.f32 0.0, %v1075
      %v1077 = vpop.f32.mrb[0].mxu0
      %v1078 = vpop.f32.mrb[0].mxu0
      %v1079 = vpop.f32.mrb[0].mxu0
      %1080 = vdwg.mxu0
      %1082 = vrot.lane.b32.xlu0 %v1076, 16
      %v1083 = vpop.permute.xlu0 %1082
      %v1085 = vsel %vm861, %v965, %v1083
      %v1086 = vpack.c.bf16 %v1085, %v1085
      %v1087 = vld [vmem:[%s712] sm:$0xf]
      %v1088 = vld [vmem:[%s712 + $0x4] sm:$0xf]
      %v1089 = vld [vmem:[%s712 + $0x8] sm:$0xf]
      %v1090 = vld [vmem:[%s712 + $0xc] sm:$0xf]
      %v1091 = vld [vmem:[%s715] sm:$0x1]
      %v1093 = vlaneseq
      %v1094 = vshrl.u32 %v1093, 7
      %v1095 = vsub.s32 0, %v1094
      %v1096 = vrot.slane %v1091, %v1095
      %v1102 = vunpack.c.l.b16 %v1087
      %v1103 = vunpack.c.l.b16 %v1088
      %v1104 = vunpack.c.l.b16 %v1089
      %v1105 = vunpack.c.l.b16 %v1090
      %v1106 = vpack.c.b16 %v1103, %v1102
      %v1107 = vpack.c.b16 %v1105, %v1104
      %v1111 = vsel %vm811, %v1086, 0
      %1113 = vmatprep.subr.bf16.mxu0 0
      %1114 = vmatpush1.bf16.msra.mxu0 %v1106
      %1115 = vmatprep.subr.bf16.mxu0 0
      %1116 = vmatpush1.bf16.msra.mxu0 %v1107
      %1117 = vmatprep.subr.bf16.mxu0 0
      %1118 = vmatpush1.bf16.msra.mxu0 0
      %1119 = vmatprep.subr.bf16.mxu0 0
      %1120 = vmatpush1.bf16.msra.mxu0 0
      %1121 = vmatprep.subr.bf16.mxu0 0
      %1122 = vmatpush1.bf16.msra.mxu0 0
      %1123 = vmatprep.subr.bf16.mxu0 0
      %1124 = vmatpush1.bf16.msra.mxu0 0
      %1125 = vmatprep.subr.bf16.mxu0 0
      %1126 = vmatpush1.bf16.msra.mxu0 0
      %1127 = vmatprep.subr.bf16.mxu0 0
      %1128 = vmatpush1.bf16.msra.mxu0 0
      %1129 = vmatprep.subr.bf16.mxu0 0
      %1130 = vmatpush1.bf16.msra.mxu0 0
      %1131 = vmatprep.subr.bf16.mxu0 0
      %1132 = vmatpush1.bf16.msra.mxu0 0
      %1133 = vmatprep.subr.bf16.mxu0 0
      %1134 = vmatpush1.bf16.msra.mxu0 0
      %1135 = vmatprep.subr.bf16.mxu0 0
      %1136 = vmatpush1.bf16.msra.mxu0 0
      %1137 = vmatprep.subr.bf16.mxu0 0
      %1138 = vmatpush1.bf16.msra.mxu0 0
      %1139 = vmatprep.subr.bf16.mxu0 0
      %1140 = vmatpush1.bf16.msra.mxu0 0
      %1141 = vmatprep.subr.bf16.mxu0 0
      %1142 = vmatpush1.bf16.msra.mxu0 0
      %1143 = vmatprep.subr.bf16.mxu0 0
      %1144 = vmatpush1.bf16.msra.mxu0 0
      %1145 = vmatprep.mubr.bf16.mxu0 0
      %1146 = vmatmul.mubr.bf16.gmra.mrb[0].mxu0 %v1111
      %v1147 = vpop.f32.mrb[0].mxu0
      %v1148 = vadd.f32 %v1096, %v1147
      %v1149 = vpop.f32.mrb[0].mxu0
      %v1150 = vpop.f32.mrb[0].mxu0
      %v1151 = vpop.f32.mrb[0].mxu0
      %1152 = vdwg.mxu0
      %v1153 = vadd.f32 %v1148, %v786
      %v1154 = vld [vmem:[%s718] sm:$0x1]
      %v1155 = vld [vmem:[%s721] sm:$0x1]
      %v1156 = vsel %vm811, %v1153, 0.0
      %1157 = vadd.xlane.f32.xlu0 %v1156
      %v1158 = vpop.xlane.xlu0 %1157
      %v1159 = vrcp.pop 32.0
      %v1160 = vmul.f32 %v1158, %v1159
      %v1161 = vsub.f32 %v1153, %v1160
      %v1162 = vmul.f32 %v1161, %v1161
      %v1163 = vsel %vm811, %v1162, 0.0
      %1164 = vadd.xlane.f32.xlu0 %v1163
      %v1165 = vpop.xlane.xlu0 %1164
      %v1166 = vmul.f32 %v1165, %v1159
      %v1167 = vadd.f32 %v1166, 1e-12
      %v1168 = vrsqrt.pop %v1167
      %v1169 = vmul.f32 %v1161, %v1168
      %v1171 = vlaneseq
      %v1172 = vshrl.u32 %v1171, 7
      %v1173 = vsub.s32 0, %v1172
      %v1174 = vrot.slane %v1154, %v1173
      %v1176 = vmul.f32 %v1169, %v1174
      %v1178 = vlaneseq
      %v1179 = vshrl.u32 %v1178, 7
      %v1180 = vsub.s32 0, %v1179
      %v1181 = vrot.slane %v1155, %v1180
      %v1183 = vadd.f32 %v1176, %v1181
      %v1184 = vpack.c.bf16 %v1183, %v1183
      %v1185 = vld [vmem:[%s726] sm:$0xf]
      %v1186 = vld [vmem:[%s726 + $0x4] sm:$0xf]
      %v1187 = vld [vmem:[%s726 + $0x8] sm:$0xf]
      %v1188 = vld [vmem:[%s726 + $0xc] sm:$0xf]
      %v1189 = vld [vmem:[%s729] sm:$0x1]
      %v1191 = vlaneseq
      %v1192 = vshrl.u32 %v1191, 7
      %v1193 = vsub.s32 0, %v1192
      %v1194 = vrot.slane %v1189, %v1193
      %v1200 = vunpack.c.l.b16 %v1185
      %v1201 = vunpack.c.l.b16 %v1186
      %v1202 = vunpack.c.l.b16 %v1187
      %v1203 = vunpack.c.l.b16 %v1188
      %v1204 = vpack.c.b16 %v1201, %v1200
      %v1205 = vpack.c.b16 %v1203, %v1202
      %v1209 = vsel %vm811, %v1184, 0
      %1211 = vmatprep.subr.bf16.mxu0 0
      %1212 = vmatpush1.bf16.msra.mxu0 %v1204
      %1213 = vmatprep.subr.bf16.mxu0 0
      %1214 = vmatpush1.bf16.msra.mxu0 %v1205
      %1215 = vmatprep.subr.bf16.mxu0 0
      %1216 = vmatpush1.bf16.msra.mxu0 0
      %1217 = vmatprep.subr.bf16.mxu0 0
      %1218 = vmatpush1.bf16.msra.mxu0 0
      %1219 = vmatprep.subr.bf16.mxu0 0
      %1220 = vmatpush1.bf16.msra.mxu0 0
      %1221 = vmatprep.subr.bf16.mxu0 0
      %1222 = vmatpush1.bf16.msra.mxu0 0
      %1223 = vmatprep.subr.bf16.mxu0 0
      %1224 = vmatpush1.bf16.msra.mxu0 0
      %1225 = vmatprep.subr.bf16.mxu0 0
      %1226 = vmatpush1.bf16.msra.mxu0 0
      %1227 = vmatprep.subr.bf16.mxu0 0
      %1228 = vmatpush1.bf16.msra.mxu0 0
      %1229 = vmatprep.subr.bf16.mxu0 0
      %1230 = vmatpush1.bf16.msra.mxu0 0
      %1231 = vmatprep.subr.bf16.mxu0 0
      %1232 = vmatpush1.bf16.msra.mxu0 0
      %1233 = vmatprep.subr.bf16.mxu0 0
      %1234 = vmatpush1.bf16.msra.mxu0 0
      %1235 = vmatprep.subr.bf16.mxu0 0
      %1236 = vmatpush1.bf16.msra.mxu0 0
      %1237 = vmatprep.subr.bf16.mxu0 0
      %1238 = vmatpush1.bf16.msra.mxu0 0
      %1239 = vmatprep.subr.bf16.mxu0 0
      %1240 = vmatpush1.bf16.msra.mxu0 0
      %1241 = vmatprep.subr.bf16.mxu0 0
      %1242 = vmatpush1.bf16.msra.mxu0 0
      %1243 = vmatprep.mubr.bf16.mxu0 0
      %1244 = vmatmul.mubr.bf16.gmra.mrb[0].mxu0 %v1209
      %v1245 = vpop.f32.mrb[0].mxu0
      %v1246 = vadd.f32 %v1194, %v1245
      %v1247 = vpop.f32.mrb[0].mxu0
      %v1248 = vpop.f32.mrb[0].mxu0
      %v1249 = vpop.f32.mrb[0].mxu0
      %1250 = vdwg.mxu0
      %v1251 = vmul.f32 %v1246, 0.5
      %v1252 = vmul.f32 %v1246, 0.044715
      %v1253 = vmul.f32 %v1252, %v1246
      %v1254 = vmul.f32 %v1253, %v1246
      %v1255 = vadd.f32 %v1246, %v1254
      %v1256 = vmul.f32 %v1255, 0.7978846
      %v1257 = vtanh.pop %v1256
      %v1258 = vadd.f32 %v1257, 1.0
      %v1259 = vmul.f32 %v1251, %v1258
      %v1260 = vpack.c.bf16 %v1259, %v1259
      %v1261 = vld [vmem:[%s734] sm:$0xf]
      %v1262 = vld [vmem:[%s734 + $0x4] sm:$0xf]
      %v1263 = vld [vmem:[%s734 + $0x8] sm:$0xf]
      %v1264 = vld [vmem:[%s734 + $0xc] sm:$0xf]
      %v1265 = vld [vmem:[%s734 + $0x10] sm:$0xf]
      %v1266 = vld [vmem:[%s734 + $0x14] sm:$0xf]
      %v1267 = vld [vmem:[%s734 + $0x18] sm:$0xf]
      %v1268 = vld [vmem:[%s734 + $0x1c] sm:$0xf]
      %v1269 = vld [vmem:[%s737] sm:$0x1]
      %v1271 = vlaneseq
      %v1272 = vshrl.u32 %v1271, 7
      %v1273 = vsub.s32 0, %v1272
      %v1274 = vrot.slane %v1269, %v1273
      %v1284 = vunpack.c.l.b16 %v1261
      %v1285 = vunpack.c.l.b16 %v1262
      %v1286 = vunpack.c.l.b16 %v1263
      %v1287 = vunpack.c.l.b16 %v1264
      %v1288 = vunpack.c.l.b16 %v1265
      %v1289 = vunpack.c.l.b16 %v1266
      %v1290 = vunpack.c.l.b16 %v1267
      %v1291 = vunpack.c.l.b16 %v1268
      %v1292 = vpack.c.b16 %v1285, %v1284
      %v1293 = vpack.c.b16 %v1287, %v1286
      %v1294 = vpack.c.b16 %v1289, %v1288
      %v1295 = vpack.c.b16 %v1291, %v1290
      %vm1300 = vcmask 523264
      %v1302 = vsel %vm1300, %v1260, 0
      %1304 = vmatprep.subr.bf16.mxu0 0
      %1305 = vmatpush1.bf16.msra.mxu0 %v1292
      %1306 = vmatprep.subr.bf16.mxu0 0
      %1307 = vmatpush1.bf16.msra.mxu0 %v1293
      %1308 = vmatprep.subr.bf16.mxu0 0
      %1309 = vmatpush1.bf16.msra.mxu0 %v1294
      %1310 = vmatprep.subr.bf16.mxu0 0
      %1311 = vmatpush1.bf16.msra.mxu0 %v1295
      %1312 = vmatprep.subr.bf16.mxu0 0
      %1313 = vmatpush1.bf16.msra.mxu0 0
      %1314 = vmatprep.subr.bf16.mxu0 0
      %1315 = vmatpush1.bf16.msra.mxu0 0
      %1316 = vmatprep.subr.bf16.mxu0 0
      %1317 = vmatpush1.bf16.msra.mxu0 0
      %1318 = vmatprep.subr.bf16.mxu0 0
      %1319 = vmatpush1.bf16.msra.mxu0 0
      %1320 = vmatprep.subr.bf16.mxu0 0
      %1321 = vmatpush1.bf16.msra.mxu0 0
      %1322 = vmatprep.subr.bf16.mxu0 0
      %1323 = vmatpush1.bf16.msra.mxu0 0
      %1324 = vmatprep.subr.bf16.mxu0 0
      %1325 = vmatpush1.bf16.msra.mxu0 0
      %1326 = vmatprep.subr.bf16.mxu0 0
      %1327 = vmatpush1.bf16.msra.mxu0 0
      %1328 = vmatprep.subr.bf16.mxu0 0
      %1329 = vmatpush1.bf16.msra.mxu0 0
      %1330 = vmatprep.subr.bf16.mxu0 0
      %1331 = vmatpush1.bf16.msra.mxu0 0
      %1332 = vmatprep.subr.bf16.mxu0 0
      %1333 = vmatpush1.bf16.msra.mxu0 0
      %1334 = vmatprep.subr.bf16.mxu0 0
      %1335 = vmatpush1.bf16.msra.mxu0 0
      %1336 = vmatprep.mubr.bf16.mxu0 0
      %1337 = vmatmul.mubr.bf16.gmra.mrb[0].mxu0 %v1302
      %v1338 = vpop.f32.mrb[0].mxu0
      %v1339 = vadd.f32 %v1274, %v1338
      %v1340 = vpop.f32.mrb[0].mxu0
      %v1341 = vpop.f32.mrb[0].mxu0
      %v1342 = vpop.f32.mrb[0].mxu0
      %1343 = vdwg.mxu0
      %v1344 = vadd.f32 %v1339, %v1183
      %v1345 = vld [vmem:[%s740] sm:$0x1]
      %v1346 = vld [vmem:[%s743] sm:$0x1]
      %v1347 = vsel %vm811, %v1344, 0.0
      %1348 = vadd.xlane.f32.xlu0 %v1347
      %v1349 = vpop.xlane.xlu0 %1348
      %v1350 = vmul.f32 %v1349, %v1159
      %v1351 = vsub.f32 %v1344, %v1350
      %v1352 = vmul.f32 %v1351, %v1351
      %v1353 = vsel %vm811, %v1352, 0.0
      %1354 = vadd.xlane.f32.xlu0 %v1353
      %v1355 = vpop.xlane.xlu0 %1354
      %v1356 = vmul.f32 %v1355, %v1159
      %v1357 = vadd.f32 %v1356, 1e-12
      %v1358 = vrsqrt.pop %v1357
      %v1359 = vmul.f32 %v1351, %v1358
      %v1361 = vlaneseq
      %v1362 = vshrl.u32 %v1361, 7
      %v1363 = vsub.s32 0, %v1362
      %v1364 = vrot.slane %v1345, %v1363
      %v1366 = vmul.f32 %v1359, %v1364
      %v1368 = vlaneseq
      %v1369 = vshrl.u32 %v1368, 7
      %v1370 = vsub.s32 0, %v1369
      %v1371 = vrot.slane %v1346, %v1370
      %v1373 = vadd.f32 %v1366, %v1371
      %1374 = vst.msk [vmem:[#allocation2] sm:$0xff] %vm811, %v1373
      %p1375 = scmp.eq.s32.totalorder %s33, 1
      // Predicated region
      $region93: #{bert_model_encoder_forward.1} parent=87 // pred_check
        %p1376 = pneg %p1375
      $region94: #{bert_model_encoder_forward.1} parent=87 // pred_check_branch
        %1378 = sbr.rel (%p1376) target = $region96
      $region95: #{bert_model_encoder_forward.1} parent=87 // pred_region
        %v1379 = vpack.c.bf16 %v1373, %v1373
        %v1380 = vld [vmem:[%s15] sm:$0xf]
        %v1381 = vld [vmem:[%s15 + $0x4] sm:$0xf]
        %v1382 = vld [vmem:[%s15 + $0x8] sm:$0xf]
        %v1383 = vld [vmem:[%s15 + $0xc] sm:$0xf]
        %v1384 = vld [vmem:[%s16] sm:$0x1]
        %v1386 = vlaneseq
        %v1387 = vshrl.u32 %v1386, 7
        %v1388 = vsub.s32 0, %v1387
        %v1389 = vrot.slane %v1384, %v1388
        %v1395 = vunpack.c.l.b16 %v1380
        %v1396 = vunpack.c.l.b16 %v1381
        %v1397 = vunpack.c.l.b16 %v1382
        %v1398 = vunpack.c.l.b16 %v1383
        %v1399 = vpack.c.b16 %v1396, %v1395
        %v1400 = vpack.c.b16 %v1398, %v1397
        %v1404 = vsel %vm811, %v1379, 0
        %1406 = vmatprep.subr.bf16.mxu0 0
        %1407 = vmatpush1.bf16.msra.mxu0 %v1399
        %1408 = vmatprep.subr.bf16.mxu0 0
        %1409 = vmatpush1.bf16.msra.mxu0 %v1400
        %1410 = vmatprep.subr.bf16.mxu0 0
        %1411 = vmatpush1.bf16.msra.mxu0 0
        %1412 = vmatprep.subr.bf16.mxu0 0
        %1413 = vmatpush1.bf16.msra.mxu0 0
        %1414 = vmatprep.subr.bf16.mxu0 0
        %1415 = vmatpush1.bf16.msra.mxu0 0
        %1416 = vmatprep.subr.bf16.mxu0 0
        %1417 = vmatpush1.bf16.msra.mxu0 0
        %1418 = vmatprep.subr.bf16.mxu0 0
        %1419 = vmatpush1.bf16.msra.mxu0 0
        %1420 = vmatprep.subr.bf16.mxu0 0
        %1421 = vmatpush1.bf16.msra.mxu0 0
        %1422 = vmatprep.subr.bf16.mxu0 0
        %1423 = vmatpush1.bf16.msra.mxu0 0
        %1424 = vmatprep.subr.bf16.mxu0 0
        %1425 = vmatpush1.bf16.msra.mxu0 0
        %1426 = vmatprep.subr.bf16.mxu0 0
        %1427 = vmatpush1.bf16.msra.mxu0 0
        %1428 = vmatprep.subr.bf16.mxu0 0
        %1429 = vmatpush1.bf16.msra.mxu0 0
        %1430 = vmatprep.subr.bf16.mxu0 0
        %1431 = vmatpush1.bf16.msra.mxu0 0
        %1432 = vmatprep.subr.bf16.mxu0 0
        %1433 = vmatpush1.bf16.msra.mxu0 0
        %1434 = vmatprep.subr.bf16.mxu0 0
        %1435 = vmatpush1.bf16.msra.mxu0 0
        %1436 = vmatprep.subr.bf16.mxu0 0
        %1437 = vmatpush1.bf16.msra.mxu0 0
        %1438 = vmatprep.mubr.bf16.mxu0 0
        %1439 = vmatmul.mubr.bf16.gmra.mrb[0].mxu0 %v1404
        %v1440 = vpop.f32.mrb[0].mxu0
        %v1441 = vadd.f32 %v1389, %v1440
        %v1442 = vpop.f32.mrb[0].mxu0
        %v1443 = vpop.f32.mrb[0].mxu0
        %v1444 = vpop.f32.mrb[0].mxu0
        %1445 = vdwg.mxu0
        %1446 = vst [vmem:[%s747] sm:$0xff] %v1441
      $region96: #{bert_model_encoder_forward.1} parent=87 // pred_fallthru
        _
      %p1447 = scmp.lt.s32.totalorder %s32, 1
      %s1448 = scalar_select %p1447, %s32, 1
      %s1449 = smul.addr %s1448, 8
      %s1450 = scalar_lea.vmem %s17, %s1449
      // Predicated region
      $region97: #{bert_model_encoder_forward.1} parent=87 // pred_check
        %p1451 = pneg %p480
      $region98: #{bert_model_encoder_forward.1} parent=87 // pred_check_branch
        %1453 = sbr.rel (%p1451) target = $region100
      $region99: #{bert_model_encoder_forward.1} parent=87 // pred_region
        _
      $region100: #{bert_model_encoder_forward.1} parent=87 // pred_fallthru
        _
    $region88: #{bert_model_encoder_forward.1} parent=5 // pred_fallthru
      _
    %p1454 = scmp.le.s32.totalorder 2, %s23
    // Predicated region
    $region101: #{bert_model_encoder_forward.1} parent=5 // pred_check
      %p1455 = pneg %p1454
    $region102: #{bert_model_encoder_forward.1} parent=5 // pred_check_branch
      %1457 = sbr.rel (%p1455) target = $region104
    $region103: #{bert_model_encoder_forward.1} parent=5 // pred_region
      %s1458 = ssub.s32 %s23, 2
      // Predicated region
      $region105: #{bert_model_encoder_forward.1} parent=103 // pred_check
        %p1459 = pneg %p486
      $region106: #{bert_model_encoder_forward.1} parent=103 // pred_check_branch
        %1461 = sbr.rel (%p1459) target = $region108
      $region107: #{bert_model_encoder_forward.1} parent=103 // pred_region
        %p1462 = scmp.lt.s32.totalorder %s34, 1
        %s1463 = scalar_select %p1462, %s34, 1
        %s1464 = smul.addr %s1463, 8
        %s1465 = scalar_lea.vmem %s17, %s1464
      $region108: #{bert_model_encoder_forward.1} parent=103 // pred_fallthru
        _
    $region104: #{bert_model_encoder_forward.1} parent=5 // pred_fallthru
      _
  $region6: #{bert_model_encoder_forward.1} parent=0 // loop_footer
    %s27 = sadd.s32 1, %s23
  $region7: #{bert_model_encoder_forward.1} parent=0 // loop_footer_branch
    %22 = sbr.rel target = $region3
  $region8: #{bert_model_encoder_forward.1} parent=0 // loop_exit
    _

</llo_original>
